<compile_context>
chip_gen: v7x
topology: tpu7x:2x2x1
jax: 0.10.0
libtpu: 0.0.40
codegen_flags: <defaults>
</compile_context>

<pallas_src>
import jax
import jax.numpy as jnp
from jax import lax
from jax.experimental import pallas as pl
from jax.experimental.pallas import tpu as pltpu

# --- module hyperparameters (from the PyTorch source) ---
block_size = 16
n_blocks = 2
n_embd = 32
n_heads = 2
head_size = n_embd // n_heads  # 16  (num_heads * head_size == n_embd)


def mha_kernel(xg_ref, wg_ref, bg_ref, wpg_ref, bp_ref, o_ref):
    """One grid step = one block of batches, all (batch, head) groups at once.

    xg_ref : (Gb, T, C)      per-group input (x duplicated per head, g = b*H + h)
    wg_ref : (Gb, C, 3*hs)   per-group fused [Wq | Wk | Wv]
    bg_ref : (Gb, T, 3*hs)   per-group fused positional bias [q | k | v]
    wpg_ref: (Gb, hs, C)     per-group rows of the output projection
    bp_ref : (1, C)          output projection bias
    o_ref  : (bb*T, C)       output rows of this batch block (2-D slab)
    """
    Gb, T, C = xg_ref.shape
    H, hs = n_heads, head_size
    bb = Gb // H
    scale = float(hs) ** -0.5

    # (1) QKV projection for every (batch, head) group: one batched dot_general.
    y = lax.dot_general(xg_ref[...], wg_ref[...], (((2,), (1,)), ((0,), (0,))),
                        preferred_element_type=jnp.float32) + bg_ref[...]      # (Gb, T, 3hs)
    q = y[:, :, :hs]
    k = y[:, :, hs:2 * hs]
    v = y[:, :, 2 * hs:]

    # (2) Scores q @ k^T for all groups in one batched dot_general (no transpose).
    att = lax.dot_general(q, k, (((2,), (2,)), ((0,), (0,))),
                          preferred_element_type=jnp.float32) * scale          # (Gb, T, T)

    # Causal mask; finite fill value avoids inf-inf = NaN if masks ever change.
    row = lax.broadcasted_iota(jnp.int32, (T, T), 0)
    col = lax.broadcasted_iota(jnp.int32, (T, T), 1)
    att = jnp.where((col <= row)[None], att, jnp.float32(-1e30))

    # (3) One numerically-stable softmax over all groups.  Exact f32 divide:
    #     the approx (bf16) EUP reciprocal caused the previous >1e-3 mismatch.
    att = att - jnp.max(att, axis=-1, keepdims=True)
    e = jnp.exp(att)
    p = e / jnp.sum(e, axis=-1, keepdims=True)
    # TODO(synk): attention-prob dropout omitted (eval-mode identity).

    # (4) probs @ values, batched over groups.
    pv = lax.dot_general(p, v, (((2,), (1,)), ((0,), (0,))),
                         preferred_element_type=jnp.float32)                   # (Gb, T, hs)

    # (5) Output projection per group, then sum the H head contributions of each
    #     batch (algebraic split of the concat -> no cross-lane shuffles).
    proj = lax.dot_general(pv, wpg_ref[...], (((2,), (1,)), ((0,), (0,))),
                           preferred_element_type=jnp.float32)                 # (Gb, T, C)
    proj = proj.reshape(bb, H, T, C)          # leading-dim split only: free
    out = proj[:, 0]
    for h in range(1, H):                     # tiny static unroll (H == 2)
        out = out + proj[:, h]
    out2d = out.reshape(bb * T, C) + bp_ref[...]
    # TODO(synk): output dropout omitted (eval-mode identity).
    o_ref[...] = out2d.astype(o_ref.dtype)


def multi_head_attention(x, wq_t, wk_t, wv_t, lp, gp, wp_t, bp, *, batches_per_step=None):
    """Forward pass of MultiHeadAttention (eval mode).

    x:    (B, T, C)
    wq_t/wk_t/wv_t: (n_heads, C, head_size)   Linear weights pre-transposed to (in, out)
    lp:   (n_heads, 3, head_size)             local_pos embedding tables
    gp:   (n_heads, block_size, head_size)    global_pos embedding tables
    wp_t: (C, C); bp: (1, C)                  output projection
    batches_per_step: batches folded into one grid step.  Default B (single
      step; best on v5e/v6e's single TensorCore).  Use B//2 on v7x so both
      TensorCores get a "parallel" grid step.
    """
    B, T, C = x.shape
    H, hs = n_heads, head_size
    if batches_per_step is None:
        batches_per_step = B
    bb = batches_per_step
    assert B % bb == 0, "batches_per_step must divide B"
    Gb = bb * H                              # (batch, head) groups per grid step
    N = B * T

    # ---- wrapper-side packing (layout plumbing only; no in-kernel relayouts) ----
    # per-head fused QKV weight (C, 3*hs), column order [q | k | v]
    w_heads = jnp.stack(
        [jnp.concatenate([wq_t[h], wk_t[h], wv_t[h]], axis=1) for h in range(H)], axis=0)  # (H, C, 3hs)
    q_bias = jnp.broadcast_to(lp[:, 0][:, None, :], (H, T, hs))
    k_bias = lp[:, 1][:, None, :] + gp[:, :T]
    v_bias = lp[:, 2][:, None, :] + gp[:, :T]
    b_heads = jnp.concatenate([q_bias, k_bias, v_bias], axis=2)                             # (H, T, 3hs)
    wp_heads = wp_t.reshape(H, hs, C)                 # rows h*hs:(h+1)*hs belong to head h

    # group axis g = b*H + h ; per-step weight slabs repeat the per-head slabs bb times.
    x_g = jnp.repeat(x, H, axis=0)                    # (B*H, T, C),  x_g[b*H + h] = x[b]
    w_rep = jnp.tile(w_heads, (bb, 1, 1))             # (Gb, C, 3hs)
    b_rep = jnp.tile(b_heads, (bb, 1, 1))             # (Gb, T, 3hs)
    wp_rep = jnp.tile(wp_heads, (bb, 1, 1))           # (Gb, hs, C)

    out2d = pl.pallas_call(
        mha_kernel,
        out_shape=jax.ShapeDtypeStruct((N, C), x.dtype),
        grid_spec=pltpu.PrefetchScalarGridSpec(
            num_scalar_prefetch=0,
            grid=(B // bb,),
            in_specs=[
                pl.BlockSpec((Gb, T, C), lambda i: (i, 0, 0)),        # x groups of this batch block
                pl.BlockSpec((Gb, C, 3 * hs), lambda i: (0, 0, 0)),   # fused QKV weights (resident)
                pl.BlockSpec((Gb, T, 3 * hs), lambda i: (0, 0, 0)),   # fused positional bias (resident)
                pl.BlockSpec((Gb, hs, C), lambda i: (0, 0, 0)),       # output-projection rows (resident)
                pl.BlockSpec((1, C), lambda i: (0, 0)),               # output-projection bias
            ],
            out_specs=pl.BlockSpec((bb * T, C), lambda i: (i, 0)),    # 2-D output slab
        ),
        compiler_params=pltpu.CompilerParams(dimension_semantics=("parallel",)),
    )(x_g, w_rep, b_rep, wp_rep, bp)
    return out2d.reshape(B, T, C)


def reference(x, wq_t, wk_t, wv_t, lp, gp, wp_t, bp):
    """Pure-JAX re-statement of the PyTorch forward (eval mode)."""
    B, T, C = x.shape
    mask = jnp.tril(jnp.ones((T, T), dtype=bool))
    outs = []
    for h in range(n_heads):
        q = x @ wq_t[h] + lp[h, 0][None, None, :]
        k = x @ wk_t[h] + lp[h, 1][None, None, :] + gp[h, :T][None, :, :]
        v = x @ wv_t[h] + lp[h, 2][None, None, :] + gp[h, :T][None, :, :]
        att = (q @ jnp.swapaxes(k, -2, -1)) * float(head_size) ** -0.5
        att = jnp.where(mask[None], att, -jnp.inf)
        att = jax.nn.softmax(att, axis=-1)
        outs.append(att @ v)
    cat = jnp.concatenate(outs, axis=-1)
    return cat @ wp_t + bp[0]


if __name__ == "__main__":
    B, T, C = 2, block_size, n_embd

    key = jax.random.PRNGKey(0)
    ks = jax.random.split(key, 8)

    x = jax.random.normal(ks[0], (B, T, C), dtype=jnp.float32)

    # Deterministic synthetic parameters (shapes match the PyTorch module);
    # Linear weights stored pre-transposed to (in_features, out_features).
    w_scale = float(C) ** -0.5
    pos_std = 0.02 * float(n_blocks * n_heads) ** -0.5
    wq_t = jax.random.normal(ks[1], (n_heads, C, head_size), jnp.float32) * w_scale
    wk_t = jax.random.normal(ks[2], (n_heads, C, head_size), jnp.float32) * w_scale
    wv_t = jax.random.normal(ks[3], (n_heads, C, head_size), jnp.float32) * w_scale
    lp = jax.random.normal(ks[4], (n_heads, 3, head_size), jnp.float32) * pos_std
    gp = jax.random.normal(ks[5], (n_heads, block_size, head_size), jnp.float32) * pos_std
    wp_t = jax.random.normal(ks[6], (C, C), jnp.float32) * w_scale
    bp = jax.random.normal(ks[7], (1, C), jnp.float32) * 0.01

    ref = reference(x, wq_t, wk_t, wv_t, lp, gp, wp_t, bp)

    # Default: whole batch in one grid step (v5e/v6e single-TC configuration).
    out = multi_head_attention(x, wq_t, wk_t, wv_t, lp, gp, wp_t, bp)
    jax.block_until_ready(out)
    assert out.shape == (B, T, C)
    assert jnp.allclose(out, ref, atol=1e-3, rtol=1e-3), "mismatch vs JAX reference (1 step)"

    # Split-batch grid: the v7x megacore path (2 parallel grid steps), same numerics.
    out2 = multi_head_attention(x, wq_t, wk_t, wv_t, lp, gp, wp_t, bp, batches_per_step=1)
    jax.block_until_ready(out2)
    assert jnp.allclose(out2, ref, atol=1e-3, rtol=1e-3), "mismatch vs JAX reference (split grid)"

    print("KERNEL_OK")
</pallas_src>

<mosaic_0001>
module attributes {stable_mosaic.version = 11 : i64} {
  func.func @mha_kernel(%arg0: i32, %arg1: memref<4x16x32xf32, #tpu.memory_space<vmem>>, %arg2: memref<4x32x48xf32, #tpu.memory_space<vmem>>, %arg3: memref<4x16x48xf32, #tpu.memory_space<vmem>>, %arg4: memref<4x16x32xf32, #tpu.memory_space<vmem>>, %arg5: memref<1x32xf32, #tpu.memory_space<vmem>>, %arg6: memref<32x32xf32, #tpu.memory_space<vmem>>) attributes {dimension_semantics = [#tpu.dimension_semantics<parallel>], iteration_bounds = array<i64: 1>, scalar_prefetch = 0 : i64, scratch_operands = 0 : i64, tpu.core_type = #tpu.core_type<tc>, window_params = [{transform_indices = @transform_0, window_bounds = array<i64: 4, 16, 32>}, {pipeline_mode = #tpu.pipeline_mode<synchronous>, transform_indices = @transform_1, window_bounds = array<i64: 4, 32, 48>}, {pipeline_mode = #tpu.pipeline_mode<synchronous>, transform_indices = @transform_2, window_bounds = array<i64: 4, 16, 48>}, {pipeline_mode = #tpu.pipeline_mode<synchronous>, transform_indices = @transform_3, window_bounds = array<i64: 4, 16, 32>}, {pipeline_mode = #tpu.pipeline_mode<synchronous>, transform_indices = @transform_4, window_bounds = array<i64: 1, 32>}, {transform_indices = @transform_5, window_bounds = array<i64: 32, 32>}]} {
    %c0 = arith.constant 0 : index
    %c0_0 = arith.constant 0 : index
    %c0_1 = arith.constant 0 : index
    %0 = vector.load %arg1[%c0, %c0_0, %c0_1] : memref<4x16x32xf32, #tpu.memory_space<vmem>>, vector<4x16x32xf32>
    %c0_2 = arith.constant 0 : index
    %c0_3 = arith.constant 0 : index
    %c0_4 = arith.constant 0 : index
    %1 = vector.load %arg2[%c0_2, %c0_3, %c0_4] : memref<4x32x48xf32, #tpu.memory_space<vmem>>, vector<4x32x48xf32>
    %cst = arith.constant dense<0.000000e+00> : vector<4x16x48xf32>
    %2 = tpu.matmul %0, %1, %cst {dimension_numbers = #tpu.dot_dimension_numbers<[2], [1], [1], [2], [0, 0, 0, 1, 1, 2], [0], [0]>} : vector<4x16x32xf32>, vector<4x32x48xf32>, vector<4x16x48xf32> -> vector<4x16x48xf32>
    %c0_5 = arith.constant 0 : index
    %c0_6 = arith.constant 0 : index
    %c0_7 = arith.constant 0 : index
    %3 = vector.load %arg3[%c0_5, %c0_6, %c0_7] : memref<4x16x48xf32, #tpu.memory_space<vmem>>, vector<4x16x48xf32>
    %4 = arith.addf %2, %3 : vector<4x16x48xf32>
    %5 = vector.extract_strided_slice %4 {offsets = [0, 0, 0], sizes = [4, 16, 16], strides = [1, 1, 1]} : vector<4x16x48xf32> to vector<4x16x16xf32>
    %6 = vector.extract_strided_slice %4 {offsets = [0, 0, 16], sizes = [4, 16, 16], strides = [1, 1, 1]} : vector<4x16x48xf32> to vector<4x16x16xf32>
    %7 = vector.extract_strided_slice %4 {offsets = [0, 0, 32], sizes = [4, 16, 16], strides = [1, 1, 1]} : vector<4x16x48xf32> to vector<4x16x16xf32>
    %cst_8 = arith.constant dense<0.000000e+00> : vector<4x16x16xf32>
    %8 = tpu.matmul %5, %6, %cst_8 {dimension_numbers = #tpu.dot_dimension_numbers<[2], [2], [1], [1], [0, 0, 0, 1, 1, 1], [0], [0]>} : vector<4x16x16xf32>, vector<4x16x16xf32>, vector<4x16x16xf32> -> vector<4x16x16xf32>
    %cst_9 = arith.constant 2.500000e-01 : f32
    %9 = vector.broadcast %cst_9 : f32 to vector<4x16x16xf32>
    %10 = arith.mulf %8, %9 : vector<4x16x16xf32>
    %11 = tpu.iota {dimensions = array<i32: 0>} : vector<16x16xi32>
    %12 = tpu.iota {dimensions = array<i32: 1>} : vector<16x16xi32>
    %13 = arith.cmpi sle, %12, %11 : vector<16x16xi32>
    %14 = vector.shape_cast %13 : vector<16x16xi1> to vector<1x16x16xi1>
    %cst_10 = arith.constant -1.000000e+30 : f32
    %15 = vector.shape_cast %14 : vector<1x16x16xi1> to vector<1x16x16xi1>
    %16 = vector.broadcast %15 : vector<1x16x16xi1> to vector<4x16x16xi1>
    %17 = vector.broadcast %cst_10 : f32 to vector<4x16x16xf32>
    %18 = arith.select %16, %10, %17 : vector<4x16x16xi1>, vector<4x16x16xf32>
    %cst_11 = arith.constant dense<0xFF800000> : vector<4x16xf32>
    %19 = vector.multi_reduction <maximumf>, %18, %cst_11 [2] : vector<4x16x16xf32> to vector<4x16xf32>
    %20 = vector.shape_cast %19 : vector<4x16xf32> to vector<4x16x1xf32>
    %21 = vector.broadcast %20 : vector<4x16x1xf32> to vector<4x16x16xf32>
    %22 = arith.subf %18, %21 : vector<4x16x16xf32>
    %23 = math.exp %22 : vector<4x16x16xf32>
    %cst_12 = arith.constant dense<0.000000e+00> : vector<4x16xf32>
    %24 = vector.multi_reduction <add>, %23, %cst_12 [2] : vector<4x16x16xf32> to vector<4x16xf32>
    %25 = vector.shape_cast %24 : vector<4x16xf32> to vector<4x16x1xf32>
    %26 = vector.broadcast %25 : vector<4x16x1xf32> to vector<4x16x16xf32>
    %27 = arith.divf %23, %26 : vector<4x16x16xf32>
    %cst_13 = arith.constant dense<0.000000e+00> : vector<4x16x16xf32>
    %28 = tpu.matmul %27, %7, %cst_13 {dimension_numbers = #tpu.dot_dimension_numbers<[2], [1], [1], [2], [0, 0, 0, 1, 1, 2], [0], [0]>} : vector<4x16x16xf32>, vector<4x16x16xf32>, vector<4x16x16xf32> -> vector<4x16x16xf32>
    %c0_14 = arith.constant 0 : index
    %c0_15 = arith.constant 0 : index
    %c0_16 = arith.constant 0 : index
    %29 = vector.load %arg4[%c0_14, %c0_15, %c0_16] : memref<4x16x32xf32, #tpu.memory_space<vmem>>, vector<4x16x32xf32>
    %cst_17 = arith.constant dense<0.000000e+00> : vector<4x16x32xf32>
    %30 = tpu.matmul %28, %29, %cst_17 {dimension_numbers = #tpu.dot_dimension_numbers<[2], [1], [1], [2], [0, 0, 0, 1, 1, 2], [0], [0]>} : vector<4x16x16xf32>, vector<4x16x32xf32>, vector<4x16x32xf32> -> vector<4x16x32xf32>
    %31 = vector.shape_cast %30 : vector<4x16x32xf32> to vector<2x2x16x32xf32>
    %32 = vector.extract_strided_slice %31 {offsets = [0, 0, 0, 0], sizes = [2, 1, 16, 32], strides = [1, 1, 1, 1]} : vector<2x2x16x32xf32> to vector<2x1x16x32xf32>
    %33 = vector.shape_cast %32 : vector<2x1x16x32xf32> to vector<2x16x32xf32>
    %34 = vector.extract_strided_slice %31 {offsets = [0, 1, 0, 0], sizes = [2, 1, 16, 32], strides = [1, 1, 1, 1]} : vector<2x2x16x32xf32> to vector<2x1x16x32xf32>
    %35 = vector.shape_cast %34 : vector<2x1x16x32xf32> to vector<2x16x32xf32>
    %36 = arith.addf %33, %35 : vector<2x16x32xf32>
    %37 = vector.shape_cast %36 : vector<2x16x32xf32> to vector<32x32xf32>
    %c0_18 = arith.constant 0 : index
    %c0_19 = arith.constant 0 : index
    %38 = vector.load %arg5[%c0_18, %c0_19] : memref<1x32xf32, #tpu.memory_space<vmem>>, vector<1x32xf32>
    %39 = vector.broadcast %38 : vector<1x32xf32> to vector<32x32xf32>
    %40 = arith.addf %37, %39 : vector<32x32xf32>
    %c0_20 = arith.constant 0 : index
    %c0_21 = arith.constant 0 : index
    %41 = vector.load %arg6[%c0_20, %c0_21] : memref<32x32xf32, #tpu.memory_space<vmem>>, vector<32x32xf32>
    tpu.vector_store %arg6[%c0_20, %c0_21], %40 {strides = array<i32>} : memref<32x32xf32, #tpu.memory_space<vmem>>, vector<32x32xf32>,
    return
  }
  func.func @transform_0(%arg0: i32) -> (i32, i32, i32) {
    %c0_i32 = arith.constant 0 : i32
    %c0_i32_0 = arith.constant 0 : i32
    %c0_i32_1 = arith.constant 0 : i32
    return %arg0, %c0_i32, %c0_i32_0 : i32, i32, i32
  }
  func.func @transform_1(%arg0: i32) -> (i32, i32, i32) {
    %c0_i32 = arith.constant 0 : i32
    %c0_i32_0 = arith.constant 0 : i32
    %c0_i32_1 = arith.constant 0 : i32
    %c0_i32_2 = arith.constant 0 : i32
    return %c0_i32, %c0_i32_0, %c0_i32_1 : i32, i32, i32
  }
  func.func @transform_2(%arg0: i32) -> (i32, i32, i32) {
    %c0_i32 = arith.constant 0 : i32
    %c0_i32_0 = arith.constant 0 : i32
    %c0_i32_1 = arith.constant 0 : i32
    %c0_i32_2 = arith.constant 0 : i32
    return %c0_i32, %c0_i32_0, %c0_i32_1 : i32, i32, i32
  }
  func.func @transform_3(%arg0: i32) -> (i32, i32, i32) {
    %c0_i32 = arith.constant 0 : i32
    %c0_i32_0 = arith.constant 0 : i32
    %c0_i32_1 = arith.constant 0 : i32
    %c0_i32_2 = arith.constant 0 : i32
    return %c0_i32, %c0_i32_0, %c0_i32_1 : i32, i32, i32
  }
  func.func @transform_4(%arg0: i32) -> (i32, i32) {
    %c0_i32 = arith.constant 0 : i32
    %c0_i32_0 = arith.constant 0 : i32
    %c0_i32_1 = arith.constant 0 : i32
    return %c0_i32, %c0_i32_0 : i32, i32
  }
  func.func @transform_5(%arg0: i32) -> (i32, i32) {
    %c0_i32 = arith.constant 0 : i32
    %c0_i32_0 = arith.constant 0 : i32
    return %arg0, %c0_i32 : i32, i32
  }
}

</mosaic_0001>

<llo_original>
// kernel: tpu_custom_call.1
$region0: #{tpu_custom_call.1}
  #allocation0 [shape = 'u32[]', space=smem, size = 0x4, offset = 0x4, fixed_abs, tag = 'smem constant byte address 0x4 - core index']
  #allocation1 [shape = 'u32[144,128]{1,0:T(1,128)}', space=vmem, size = 0x12000, scoped, tag = 'internal scratch']
  %s0 = inlined_call_operand.hbm [shape: f32[4,16,32], index: 0, kind: input, shape index: {}]
  %s1 = inlined_call_operand.hbm [shape: f32[4,32,48], index: 1, kind: input, shape index: {}]
  %s2 = inlined_call_operand.hbm [shape: f32[4,16,48], index: 2, kind: input, shape index: {}]
  %s3 = inlined_call_operand.hbm [shape: f32[4,16,32], index: 3, kind: input, shape index: {}]
  %s4 = inlined_call_operand.vmem [shape: f32[1,32], index: 4, kind: input, shape index: {}]
  %s5 = inlined_call_operand.hbm [shape: f32[32,32], index: 5, kind: output, shape index: {}]
  %s6 = sld [smem:[#allocation0]]
  $region46: #{tpu_custom_call.1} parent=0
    _
  %s8 = ssub.s32 1, %s6
  %s9 = scalar_select 0, %s8, %s6
  $region1: #{tpu_custom_call.1} parent=0
    #allocation2 [shape = 'u8[32768]{0}', space=vmem, size = 0x8000, scoped, tag = 'input window, operand 0, single buffered']
    #allocation3 [shape = 's32[1]{0}', space=sflag, size = 0x4, scoped, tag = 'scoped memory for tpu_custom_call.1']
    #allocation4 [shape = 's32[1]{0}', space=sflag, size = 0x4, scoped, tag = 'scoped memory for tpu_custom_call.1']
    #allocation5 [shape = 'u8[65536]{0}', space=vmem, size = 0x10000, scoped, tag = 'input window, operand 1, single buffered']
    #allocation6 [shape = 's32[1]{0}', space=sflag, size = 0x4, scoped, tag = 'scoped memory for tpu_custom_call.1']
    #allocation7 [shape = 'u8[32768]{0}', space=vmem, size = 0x8000, scoped, tag = 'input window, operand 2, single buffered']
    #allocation8 [shape = 'u8[32768]{0}', space=vmem, size = 0x8000, scoped, tag = 'input window, operand 3, single buffered']
    #allocation9 [shape = 's32[1]{0}', space=sflag, size = 0x4, scoped, tag = 'scoped memory for tpu_custom_call.1']
    #allocation10 [shape = 'u8[16384]{0}', space=vmem, size = 0x4000, scoped, tag = 'output window, operand 0, single buffered']
    %10 = vsyncpa [#allocation3], 0
    %11 = vsyncpa [#allocation6], 0
    %12 = vsyncpa [#allocation9], 0
    %13 = vsyncpa [#allocation4], 0
    // Predicated region
    $region2: #{tpu_custom_call.1} parent=1 // pred_check
      _
    $region3: #{tpu_custom_call.1} parent=1 // pred_check_branch
      %15 = sbr.rel (0) target = $region5
    $region4: #{tpu_custom_call.1} parent=1 // pred_region
      %s17 = ssub.s32 1024, 1024
      %18 = vsyncadd [#allocation3], %s17
      %s19 = sshll.u32 [#allocation2], 4
      %s20 = int_to_ptr.vmem [resolvable:$true] %s19
      %25 = dma.hbm_to_vmem [thread:$0]  %s0, 1024, %s20, [#allocation3], 128, 128, 8
    $region5: #{tpu_custom_call.1} parent=1 // pred_fallthru
      _
    // Predicated region
    $region6: #{tpu_custom_call.1} parent=1 // pred_check
      _
    $region7: #{tpu_custom_call.1} parent=1 // pred_check_branch
      %27 = sbr.rel (0) target = $region9
    $region8: #{tpu_custom_call.1} parent=1 // pred_region
      %s29 = ssub.s32 2048, 2048
      %30 = vsyncadd [#allocation6], %s29
      %s31 = sshll.u32 [#allocation5], 4
      %s32 = int_to_ptr.vmem [resolvable:$true] %s31
      %37 = dma.hbm_to_vmem [thread:$0]  %s1, 2048, %s32, [#allocation6], 128, 128, 8
    $region9: #{tpu_custom_call.1} parent=1 // pred_fallthru
      _
    // Predicated region
    $region10: #{tpu_custom_call.1} parent=1 // pred_check
      _
    $region11: #{tpu_custom_call.1} parent=1 // pred_check_branch
      %39 = sbr.rel (0) target = $region13
    $region12: #{tpu_custom_call.1} parent=1 // pred_region
      %s41 = ssub.s32 1024, 1024
      %42 = vsyncadd [#allocation6], %s41
      %s43 = sshll.u32 [#allocation7], 4
      %s44 = int_to_ptr.vmem [resolvable:$true] %s43
      %49 = dma.hbm_to_vmem [thread:$0]  %s2, 1024, %s44, [#allocation6], 128, 128, 8
    $region13: #{tpu_custom_call.1} parent=1 // pred_fallthru
      _
    // Predicated region
    $region14: #{tpu_custom_call.1} parent=1 // pred_check
      _
    $region15: #{tpu_custom_call.1} parent=1 // pred_check_branch
      %51 = sbr.rel (0) target = $region17
    $region16: #{tpu_custom_call.1} parent=1 // pred_region
      %s53 = ssub.s32 1024, 1024
      %54 = vsyncadd [#allocation9], %s53
      %s55 = sshll.u32 [#allocation8], 4
      %s56 = int_to_ptr.vmem [resolvable:$true] %s55
      %61 = dma.hbm_to_vmem [thread:$0]  %s3, 1024, %s56, [#allocation9], 128, 128, 8
    $region17: #{tpu_custom_call.1} parent=1 // pred_fallthru
      _
    // Predicated region
    $region18: #{tpu_custom_call.1} parent=1 // pred_check
      _
    $region19: #{tpu_custom_call.1} parent=1 // pred_check_branch
      %63 = sbr.rel (0) target = $region21
    $region20: #{tpu_custom_call.1} parent=1 // pred_region
      _
    $region21: #{tpu_custom_call.1} parent=1 // pred_fallthru
      _
    // Predicated region
    $region22: #{tpu_custom_call.1} parent=1 // pred_check
      _
    $region23: #{tpu_custom_call.1} parent=1 // pred_check_branch
      %65 = sbr.rel (0) target = $region25
    $region24: #{tpu_custom_call.1} parent=1 // pred_region
      %66 = dma.done [#allocation3], 1024
    $region25: #{tpu_custom_call.1} parent=1 // pred_fallthru
      _
    // Predicated region
    $region26: #{tpu_custom_call.1} parent=1 // pred_check
      _
    $region27: #{tpu_custom_call.1} parent=1 // pred_check_branch
      %68 = sbr.rel (0) target = $region29
    $region28: #{tpu_custom_call.1} parent=1 // pred_region
      %69 = dma.done [#allocation6], 2048
    $region29: #{tpu_custom_call.1} parent=1 // pred_fallthru
      _
    // Predicated region
    $region30: #{tpu_custom_call.1} parent=1 // pred_check
      _
    $region31: #{tpu_custom_call.1} parent=1 // pred_check_branch
      %71 = sbr.rel (0) target = $region33
    $region32: #{tpu_custom_call.1} parent=1 // pred_region
      %72 = dma.done [#allocation6], 1024
    $region33: #{tpu_custom_call.1} parent=1 // pred_fallthru
      _
    // Predicated region
    $region34: #{tpu_custom_call.1} parent=1 // pred_check
      _
    $region35: #{tpu_custom_call.1} parent=1 // pred_check_branch
      %74 = sbr.rel (0) target = $region37
    $region36: #{tpu_custom_call.1} parent=1 // pred_region
      %75 = dma.done [#allocation9], 1024
    $region37: #{tpu_custom_call.1} parent=1 // pred_fallthru
      _
    %v76 = vld [vmem:[#allocation2] sm:$0xff]
    %v77 = vld [vmem:[#allocation2 + $0x8] sm:$0xff]
    %v78 = vld [vmem:[#allocation2 + $0x10] sm:$0xff]
    %v79 = vld [vmem:[#allocation2 + $0x18] sm:$0xff]
    %v80 = vld [vmem:[#allocation2 + $0x20] sm:$0xff]
    %v81 = vld [vmem:[#allocation2 + $0x28] sm:$0xff]
    %v82 = vld [vmem:[#allocation2 + $0x30] sm:$0xff]
    %v83 = vld [vmem:[#allocation2 + $0x38] sm:$0xff]
    %v84 = vld [vmem:[#allocation5] sm:$0xff]
    %v85 = vld [vmem:[#allocation5 + $0x8] sm:$0xff]
    %v86 = vld [vmem:[#allocation5 + $0x10] sm:$0xff]
    %v87 = vld [vmem:[#allocation5 + $0x18] sm:$0xff]
    %v88 = vld [vmem:[#allocation5 + $0x20] sm:$0xff]
    %v89 = vld [vmem:[#allocation5 + $0x28] sm:$0xff]
    %v90 = vld [vmem:[#allocation5 + $0x30] sm:$0xff]
    %v91 = vld [vmem:[#allocation5 + $0x38] sm:$0xff]
    %v92 = vld [vmem:[#allocation5 + $0x40] sm:$0xff]
    %v93 = vld [vmem:[#allocation5 + $0x48] sm:$0xff]
    %v94 = vld [vmem:[#allocation5 + $0x50] sm:$0xff]
    %v95 = vld [vmem:[#allocation5 + $0x58] sm:$0xff]
    %v96 = vld [vmem:[#allocation5 + $0x60] sm:$0xff]
    %v97 = vld [vmem:[#allocation5 + $0x68] sm:$0xff]
    %v98 = vld [vmem:[#allocation5 + $0x70] sm:$0xff]
    %v99 = vld [vmem:[#allocation5 + $0x78] sm:$0xff]
    %v100 = vld [vmem:[#allocation7] sm:$0xff]
    %v101 = vld [vmem:[#allocation7 + $0x8] sm:$0xff]
    %v102 = vld [vmem:[#allocation7 + $0x10] sm:$0xff]
    %v103 = vld [vmem:[#allocation7 + $0x18] sm:$0xff]
    %v104 = vld [vmem:[#allocation7 + $0x20] sm:$0xff]
    %v105 = vld [vmem:[#allocation7 + $0x28] sm:$0xff]
    %v106 = vld [vmem:[#allocation7 + $0x30] sm:$0xff]
    %v107 = vld [vmem:[#allocation7 + $0x38] sm:$0xff]
    %vm108 = vcmask 261120
    %v110 = vsel %vm108, %v76, 0
    %v113 = vsel %vm108, %v77, 0
    %115 = vmatprep.subr.mxu0 0.0
    %116 = vmatpush1.msra.mxu0 %v84
    %117 = vmatprep.subr.mxu0 0.0
    %118 = vmatpush1.msra.mxu0 %v85
    %119 = vmatprep.subr.mxu0 0.0
    %120 = vmatpush1.msra.mxu0 %v86
    %121 = vmatprep.subr.mxu0 0.0
    %122 = vmatpush1.msra.mxu0 %v87
    %123 = vmatprep.subr.mxu0 0.0
    %124 = vmatpush1.msra.mxu0 0.0
    %125 = vmatprep.subr.mxu0 0.0
    %126 = vmatpush1.msra.mxu0 0.0
    %127 = vmatprep.subr.mxu0 0.0
    %128 = vmatpush1.msra.mxu0 0.0
    %129 = vmatprep.subr.mxu0 0.0
    %130 = vmatpush1.msra.mxu0 0.0
    %131 = vmatprep.subr.mxu0 0.0
    %132 = vmatpush1.msra.mxu0 0.0
    %133 = vmatprep.subr.mxu0 0.0
    %134 = vmatpush1.msra.mxu0 0.0
    %135 = vmatprep.subr.mxu0 0.0
    %136 = vmatpush1.msra.mxu0 0.0
    %137 = vmatprep.subr.mxu0 0.0
    %138 = vmatpush1.msra.mxu0 0.0
    %139 = vmatprep.subr.mxu0 0.0
    %140 = vmatpush1.msra.mxu0 0.0
    %141 = vmatprep.subr.mxu0 0.0
    %142 = vmatpush1.msra.mxu0 0.0
    %143 = vmatprep.subr.mxu0 0.0
    %144 = vmatpush1.msra.mxu0 0.0
    %145 = vmatprep.subr.mxu0 0.0
    %146 = vmatpush1.msra.mxu0 0.0
    %147 = vmatprep.subr.mxu0 0.0
    %148 = vmatpush1.msra.mxu0 0.0
    %149 = vmatprep.subr.mxu0 0.0
    %150 = vmatpush1.msra.mxu0 0.0
    %151 = vmatprep.subr.mxu0 0.0
    %152 = vmatpush1.msra.mxu0 0.0
    %153 = vmatprep.subr.mxu0 0.0
    %154 = vmatpush1.msra.mxu0 0.0
    %155 = vmatprep.subr.mxu0 0.0
    %156 = vmatpush1.msra.mxu0 0.0
    %157 = vmatprep.subr.mxu0 0.0
    %158 = vmatpush1.msra.mxu0 0.0
    %159 = vmatprep.subr.mxu0 0.0
    %160 = vmatpush1.msra.mxu0 0.0
    %161 = vmatprep.subr.mxu0 0.0
    %162 = vmatpush1.msra.mxu0 0.0
    %163 = vmatprep.subr.mxu0 0.0
    %164 = vmatpush1.msra.mxu0 0.0
    %165 = vmatprep.subr.mxu0 0.0
    %166 = vmatpush1.msra.mxu0 0.0
    %167 = vmatprep.subr.mxu0 0.0
    %168 = vmatpush1.msra.mxu0 0.0
    %169 = vmatprep.subr.mxu0 0.0
    %170 = vmatpush1.msra.mxu0 0.0
    %171 = vmatprep.subr.mxu0 0.0
    %172 = vmatpush1.msra.mxu0 0.0
    %173 = vmatprep.subr.mxu0 0.0
    %174 = vmatpush1.msra.mxu0 0.0
    %175 = vmatprep.subr.mxu0 0.0
    %176 = vmatpush1.msra.mxu0 0.0
    %177 = vmatprep.subr.mxu0 0.0
    %178 = vmatpush1.msra.mxu0 0.0
    %179 = vmatprep.mubr.f32.mxu0 0.0
    %180 = vmatmul.mubr.f32.gmra.mrb[0].mxu0 %v110
    %v181 = vpop.f32.mrb[0].mxu0
    %v182 = vadd.f32 %v100, %v181
    %v183 = vpop.f32.mrb[0].mxu0
    %184 = vmatprep.mubr.f32.mxu0 0.0
    %185 = vmatmul.mubr.f32.gmra.mrb[0].mxu0 %v113
    %v186 = vpop.f32.mrb[0].mxu0
    %v187 = vadd.f32 %v101, %v186
    %v188 = vpop.f32.mrb[0].mxu0
    %189 = vdwg.mxu0
    %v191 = vsel %vm108, %v78, 0
    %v194 = vsel %vm108, %v79, 0
    %196 = vmatprep.subr.mxu0 0.0
    %197 = vmatpush1.msra.mxu0 %v88
    %198 = vmatprep.subr.mxu0 0.0
    %199 = vmatpush1.msra.mxu0 %v89
    %200 = vmatprep.subr.mxu0 0.0
    %201 = vmatpush1.msra.mxu0 %v90
    %202 = vmatprep.subr.mxu0 0.0
    %203 = vmatpush1.msra.mxu0 %v91
    %204 = vmatprep.subr.mxu0 0.0
    %205 = vmatpush1.msra.mxu0 0.0
    %206 = vmatprep.subr.mxu0 0.0
    %207 = vmatpush1.msra.mxu0 0.0
    %208 = vmatprep.subr.mxu0 0.0
    %209 = vmatpush1.msra.mxu0 0.0
    %210 = vmatprep.subr.mxu0 0.0
    %211 = vmatpush1.msra.mxu0 0.0
    %212 = vmatprep.subr.mxu0 0.0
    %213 = vmatpush1.msra.mxu0 0.0
    %214 = vmatprep.subr.mxu0 0.0
    %215 = vmatpush1.msra.mxu0 0.0
    %216 = vmatprep.subr.mxu0 0.0
    %217 = vmatpush1.msra.mxu0 0.0
    %218 = vmatprep.subr.mxu0 0.0
    %219 = vmatpush1.msra.mxu0 0.0
    %220 = vmatprep.subr.mxu0 0.0
    %221 = vmatpush1.msra.mxu0 0.0
    %222 = vmatprep.subr.mxu0 0.0
    %223 = vmatpush1.msra.mxu0 0.0
    %224 = vmatprep.subr.mxu0 0.0
    %225 = vmatpush1.msra.mxu0 0.0
    %226 = vmatprep.subr.mxu0 0.0
    %227 = vmatpush1.msra.mxu0 0.0
    %228 = vmatprep.subr.mxu0 0.0
    %229 = vmatpush1.msra.mxu0 0.0
    %230 = vmatprep.subr.mxu0 0.0
    %231 = vmatpush1.msra.mxu0 0.0
    %232 = vmatprep.subr.mxu0 0.0
    %233 = vmatpush1.msra.mxu0 0.0
    %234 = vmatprep.subr.mxu0 0.0
    %235 = vmatpush1.msra.mxu0 0.0
    %236 = vmatprep.subr.mxu0 0.0
    %237 = vmatpush1.msra.mxu0 0.0
    %238 = vmatprep.subr.mxu0 0.0
    %239 = vmatpush1.msra.mxu0 0.0
    %240 = vmatprep.subr.mxu0 0.0
    %241 = vmatpush1.msra.mxu0 0.0
    %242 = vmatprep.subr.mxu0 0.0
    %243 = vmatpush1.msra.mxu0 0.0
    %244 = vmatprep.subr.mxu0 0.0
    %245 = vmatpush1.msra.mxu0 0.0
    %246 = vmatprep.subr.mxu0 0.0
    %247 = vmatpush1.msra.mxu0 0.0
    %248 = vmatprep.subr.mxu0 0.0
    %249 = vmatpush1.msra.mxu0 0.0
    %250 = vmatprep.subr.mxu0 0.0
    %251 = vmatpush1.msra.mxu0 0.0
    %252 = vmatprep.subr.mxu0 0.0
    %253 = vmatpush1.msra.mxu0 0.0
    %254 = vmatprep.subr.mxu0 0.0
    %255 = vmatpush1.msra.mxu0 0.0
    %256 = vmatprep.subr.mxu0 0.0
    %257 = vmatpush1.msra.mxu0 0.0
    %258 = vmatprep.subr.mxu0 0.0
    %259 = vmatpush1.msra.mxu0 0.0
    %260 = vmatprep.mubr.f32.mxu0 0.0
    %261 = vmatmul.mubr.f32.gmra.mrb[0].mxu0 %v191
    %v262 = vpop.f32.mrb[0].mxu0
    %v263 = vadd.f32 %v102, %v262
    %v264 = vpop.f32.mrb[0].mxu0
    %265 = vmatprep.mubr.f32.mxu0 0.0
    %266 = vmatmul.mubr.f32.gmra.mrb[0].mxu0 %v194
    %v267 = vpop.f32.mrb[0].mxu0
    %v268 = vadd.f32 %v103, %v267
    %v269 = vpop.f32.mrb[0].mxu0
    %270 = vdwg.mxu0
    %v272 = vsel %vm108, %v80, 0
    %v275 = vsel %vm108, %v81, 0
    %277 = vmatprep.subr.mxu0 0.0
    %278 = vmatpush1.msra.mxu0 %v92
    %279 = vmatprep.subr.mxu0 0.0
    %280 = vmatpush1.msra.mxu0 %v93
    %281 = vmatprep.subr.mxu0 0.0
    %282 = vmatpush1.msra.mxu0 %v94
    %283 = vmatprep.subr.mxu0 0.0
    %284 = vmatpush1.msra.mxu0 %v95
    %285 = vmatprep.subr.mxu0 0.0
    %286 = vmatpush1.msra.mxu0 0.0
    %287 = vmatprep.subr.mxu0 0.0
    %288 = vmatpush1.msra.mxu0 0.0
    %289 = vmatprep.subr.mxu0 0.0
    %290 = vmatpush1.msra.mxu0 0.0
    %291 = vmatprep.subr.mxu0 0.0
    %292 = vmatpush1.msra.mxu0 0.0
    %293 = vmatprep.subr.mxu0 0.0
    %294 = vmatpush1.msra.mxu0 0.0
    %295 = vmatprep.subr.mxu0 0.0
    %296 = vmatpush1.msra.mxu0 0.0
    %297 = vmatprep.subr.mxu0 0.0
    %298 = vmatpush1.msra.mxu0 0.0
    %299 = vmatprep.subr.mxu0 0.0
    %300 = vmatpush1.msra.mxu0 0.0
    %301 = vmatprep.subr.mxu0 0.0
    %302 = vmatpush1.msra.mxu0 0.0
    %303 = vmatprep.subr.mxu0 0.0
    %304 = vmatpush1.msra.mxu0 0.0
    %305 = vmatprep.subr.mxu0 0.0
    %306 = vmatpush1.msra.mxu0 0.0
    %307 = vmatprep.subr.mxu0 0.0
    %308 = vmatpush1.msra.mxu0 0.0
    %309 = vmatprep.subr.mxu0 0.0
    %310 = vmatpush1.msra.mxu0 0.0
    %311 = vmatprep.subr.mxu0 0.0
    %312 = vmatpush1.msra.mxu0 0.0
    %313 = vmatprep.subr.mxu0 0.0
    %314 = vmatpush1.msra.mxu0 0.0
    %315 = vmatprep.subr.mxu0 0.0
    %316 = vmatpush1.msra.mxu0 0.0
    %317 = vmatprep.subr.mxu0 0.0
    %318 = vmatpush1.msra.mxu0 0.0
    %319 = vmatprep.subr.mxu0 0.0
    %320 = vmatpush1.msra.mxu0 0.0
    %321 = vmatprep.subr.mxu0 0.0
    %322 = vmatpush1.msra.mxu0 0.0
    %323 = vmatprep.subr.mxu0 0.0
    %324 = vmatpush1.msra.mxu0 0.0
    %325 = vmatprep.subr.mxu0 0.0
    %326 = vmatpush1.msra.mxu0 0.0
    %327 = vmatprep.subr.mxu0 0.0
    %328 = vmatpush1.msra.mxu0 0.0
    %329 = vmatprep.subr.mxu0 0.0
    %330 = vmatpush1.msra.mxu0 0.0
    %331 = vmatprep.subr.mxu0 0.0
    %332 = vmatpush1.msra.mxu0 0.0
    %333 = vmatprep.subr.mxu0 0.0
    %334 = vmatpush1.msra.mxu0 0.0
    %335 = vmatprep.subr.mxu0 0.0
    %336 = vmatpush1.msra.mxu0 0.0
    %337 = vmatprep.subr.mxu0 0.0
    %338 = vmatpush1.msra.mxu0 0.0
    %339 = vmatprep.subr.mxu0 0.0
    %340 = vmatpush1.msra.mxu0 0.0
    %341 = vmatprep.mubr.f32.mxu0 0.0
    %342 = vmatmul.mubr.f32.gmra.mrb[0].mxu0 %v272
    %v343 = vpop.f32.mrb[0].mxu0
    %v344 = vadd.f32 %v104, %v343
    %v345 = vpop.f32.mrb[0].mxu0
    %346 = vmatprep.mubr.f32.mxu0 0.0
    %347 = vmatmul.mubr.f32.gmra.mrb[0].mxu0 %v275
    %v348 = vpop.f32.mrb[0].mxu0
    %v349 = vadd.f32 %v105, %v348
    %v350 = vpop.f32.mrb[0].mxu0
    %351 = vdwg.mxu0
    %v353 = vsel %vm108, %v82, 0
    %v356 = vsel %vm108, %v83, 0
    %358 = vmatprep.subr.mxu0 0.0
    %359 = vmatpush1.msra.mxu0 %v96
    %360 = vmatprep.subr.mxu0 0.0
    %361 = vmatpush1.msra.mxu0 %v97
    %362 = vmatprep.subr.mxu0 0.0
    %363 = vmatpush1.msra.mxu0 %v98
    %364 = vmatprep.subr.mxu0 0.0
    %365 = vmatpush1.msra.mxu0 %v99
    %366 = vmatprep.subr.mxu0 0.0
    %367 = vmatpush1.msra.mxu0 0.0
    %368 = vmatprep.subr.mxu0 0.0
    %369 = vmatpush1.msra.mxu0 0.0
    %370 = vmatprep.subr.mxu0 0.0
    %371 = vmatpush1.msra.mxu0 0.0
    %372 = vmatprep.subr.mxu0 0.0
    %373 = vmatpush1.msra.mxu0 0.0
    %374 = vmatprep.subr.mxu0 0.0
    %375 = vmatpush1.msra.mxu0 0.0
    %376 = vmatprep.subr.mxu0 0.0
    %377 = vmatpush1.msra.mxu0 0.0
    %378 = vmatprep.subr.mxu0 0.0
    %379 = vmatpush1.msra.mxu0 0.0
    %380 = vmatprep.subr.mxu0 0.0
    %381 = vmatpush1.msra.mxu0 0.0
    %382 = vmatprep.subr.mxu0 0.0
    %383 = vmatpush1.msra.mxu0 0.0
    %384 = vmatprep.subr.mxu0 0.0
    %385 = vmatpush1.msra.mxu0 0.0
    %386 = vmatprep.subr.mxu0 0.0
    %387 = vmatpush1.msra.mxu0 0.0
    %388 = vmatprep.subr.mxu0 0.0
    %389 = vmatpush1.msra.mxu0 0.0
    %390 = vmatprep.subr.mxu0 0.0
    %391 = vmatpush1.msra.mxu0 0.0
    %392 = vmatprep.subr.mxu0 0.0
    %393 = vmatpush1.msra.mxu0 0.0
    %394 = vmatprep.subr.mxu0 0.0
    %395 = vmatpush1.msra.mxu0 0.0
    %396 = vmatprep.subr.mxu0 0.0
    %397 = vmatpush1.msra.mxu0 0.0
    %398 = vmatprep.subr.mxu0 0.0
    %399 = vmatpush1.msra.mxu0 0.0
    %400 = vmatprep.subr.mxu0 0.0
    %401 = vmatpush1.msra.mxu0 0.0
    %402 = vmatprep.subr.mxu0 0.0
    %403 = vmatpush1.msra.mxu0 0.0
    %404 = vmatprep.subr.mxu0 0.0
    %405 = vmatpush1.msra.mxu0 0.0
    %406 = vmatprep.subr.mxu0 0.0
    %407 = vmatpush1.msra.mxu0 0.0
    %408 = vmatprep.subr.mxu0 0.0
    %409 = vmatpush1.msra.mxu0 0.0
    %410 = vmatprep.subr.mxu0 0.0
    %411 = vmatpush1.msra.mxu0 0.0
    %412 = vmatprep.subr.mxu0 0.0
    %413 = vmatpush1.msra.mxu0 0.0
    %414 = vmatprep.subr.mxu0 0.0
    %415 = vmatpush1.msra.mxu0 0.0
    %416 = vmatprep.subr.mxu0 0.0
    %417 = vmatpush1.msra.mxu0 0.0
    %418 = vmatprep.subr.mxu0 0.0
    %419 = vmatpush1.msra.mxu0 0.0
    %420 = vmatprep.subr.mxu0 0.0
    %421 = vmatpush1.msra.mxu0 0.0
    %422 = vmatprep.mubr.f32.mxu0 0.0
    %423 = vmatmul.mubr.f32.gmra.mrb[0].mxu0 %v353
    %v424 = vpop.f32.mrb[0].mxu0
    %v425 = vadd.f32 %v106, %v424
    %v426 = vpop.f32.mrb[0].mxu0
    %427 = vmatprep.mubr.f32.mxu0 0.0
    %428 = vmatmul.mubr.f32.gmra.mrb[0].mxu0 %v356
    %v429 = vpop.f32.mrb[0].mxu0
    %v430 = vadd.f32 %v107, %v429
    %v431 = vpop.f32.mrb[0].mxu0
    %432 = vdwg.mxu0
    %435 = vrot.lane.b32.xlu0 %v182, 112
    %v436 = vpop.permute.xlu0 %435
    %437 = vrot.lane.b32.xlu0 %v187, 112
    %v438 = vpop.permute.xlu0 %437
    %vm439 = vcmask 130048
    %v440 = vsel %vm439, %v182, 0
    %v442 = vsel %vm439, %v187, 0
    %v444 = vsel %vm439, %v436, 0
    %v446 = vsel %vm439, %v438, 0
    %448 = vmatprep.subr.mxu0 0.0
    %449 = vmatpush1.xpose.msra.mxu0 %v444
    %450 = vmatprep.subr.mxu0 0.0
    %451 = vmatpush1.xpose.msra.mxu0 %v446
    %452 = vmatprep.subr.mxu0 0.0
    %453 = vmatpush1.xpose.msra.mxu0 0.0
    %454 = vmatprep.subr.mxu0 0.0
    %455 = vmatpush1.xpose.msra.mxu0 0.0
    %456 = vmatprep.subr.mxu0 0.0
    %457 = vmatpush1.xpose.msra.mxu0 0.0
    %458 = vmatprep.subr.mxu0 0.0
    %459 = vmatpush1.xpose.msra.mxu0 0.0
    %460 = vmatprep.subr.mxu0 0.0
    %461 = vmatpush1.xpose.msra.mxu0 0.0
    %462 = vmatprep.subr.mxu0 0.0
    %463 = vmatpush1.xpose.msra.mxu0 0.0
    %464 = vmatprep.subr.mxu0 0.0
    %465 = vmatpush1.xpose.msra.mxu0 0.0
    %466 = vmatprep.subr.mxu0 0.0
    %467 = vmatpush1.xpose.msra.mxu0 0.0
    %468 = vmatprep.subr.mxu0 0.0
    %469 = vmatpush1.xpose.msra.mxu0 0.0
    %470 = vmatprep.subr.mxu0 0.0
    %471 = vmatpush1.xpose.msra.mxu0 0.0
    %472 = vmatprep.subr.mxu0 0.0
    %473 = vmatpush1.xpose.msra.mxu0 0.0
    %474 = vmatprep.subr.mxu0 0.0
    %475 = vmatpush1.xpose.msra.mxu0 0.0
    %476 = vmatprep.subr.mxu0 0.0
    %477 = vmatpush1.xpose.msra.mxu0 0.0
    %478 = vmatprep.subr.mxu0 0.0
    %479 = vmatpush1.xpose.msra.mxu0 0.0
    %480 = vmatprep.subr.mxu0 0.0
    %481 = vmatpush1.xpose.msra.mxu0 0.0
    %482 = vmatprep.subr.mxu0 0.0
    %483 = vmatpush1.xpose.msra.mxu0 0.0
    %484 = vmatprep.subr.mxu0 0.0
    %485 = vmatpush1.xpose.msra.mxu0 0.0
    %486 = vmatprep.subr.mxu0 0.0
    %487 = vmatpush1.xpose.msra.mxu0 0.0
    %488 = vmatprep.subr.mxu0 0.0
    %489 = vmatpush1.xpose.msra.mxu0 0.0
    %490 = vmatprep.subr.mxu0 0.0
    %491 = vmatpush1.xpose.msra.mxu0 0.0
    %492 = vmatprep.subr.mxu0 0.0
    %493 = vmatpush1.xpose.msra.mxu0 0.0
    %494 = vmatprep.subr.mxu0 0.0
    %495 = vmatpush1.xpose.msra.mxu0 0.0
    %496 = vmatprep.subr.mxu0 0.0
    %497 = vmatpush1.xpose.msra.mxu0 0.0
    %498 = vmatprep.subr.mxu0 0.0
    %499 = vmatpush1.xpose.msra.mxu0 0.0
    %500 = vmatprep.subr.mxu0 0.0
    %501 = vmatpush1.xpose.msra.mxu0 0.0
    %502 = vmatprep.subr.mxu0 0.0
    %503 = vmatpush1.xpose.msra.mxu0 0.0
    %504 = vmatprep.subr.mxu0 0.0
    %505 = vmatpush1.xpose.msra.mxu0 0.0
    %506 = vmatprep.subr.mxu0 0.0
    %507 = vmatpush1.xpose.msra.mxu0 0.0
    %508 = vmatprep.subr.mxu0 0.0
    %509 = vmatpush1.xpose.msra.mxu0 0.0
    %510 = vmatprep.subr.mxu0 0.0
    %511 = vmatpush1.xpose.msra.mxu0 0.0
    %512 = vmatprep.mubr.f32.mxu0 0.0
    %513 = vmatmul.mubr.f32.gmra.mrb[0].mxu0 %v440
    %v514 = vpop.f32.mrb[0].mxu0
    %v515 = vadd.f32 0.0, %v514
    %v516 = vpop.f32.mrb[0].mxu0
    %517 = vmatprep.mubr.f32.mxu0 0.0
    %518 = vmatmul.mubr.f32.gmra.mrb[0].mxu0 %v442
    %v519 = vpop.f32.mrb[0].mxu0
    %v520 = vadd.f32 0.0, %v519
    %v521 = vpop.f32.mrb[0].mxu0
    %522 = vdwg.mxu0
    %525 = vrot.lane.b32.xlu0 %v263, 112
    %v526 = vpop.permute.xlu0 %525
    %527 = vrot.lane.b32.xlu0 %v268, 112
    %v528 = vpop.permute.xlu0 %527
    %v529 = vsel %vm439, %v263, 0
    %v531 = vsel %vm439, %v268, 0
    %v533 = vsel %vm439, %v526, 0
    %v535 = vsel %vm439, %v528, 0
    %537 = vmatprep.subr.mxu0 0.0
    %538 = vmatpush1.xpose.msra.mxu0 %v533
    %539 = vmatprep.subr.mxu0 0.0
    %540 = vmatpush1.xpose.msra.mxu0 %v535
    %541 = vmatprep.subr.mxu0 0.0
    %542 = vmatpush1.xpose.msra.mxu0 0.0
    %543 = vmatprep.subr.mxu0 0.0
    %544 = vmatpush1.xpose.msra.mxu0 0.0
    %545 = vmatprep.subr.mxu0 0.0
    %546 = vmatpush1.xpose.msra.mxu0 0.0
    %547 = vmatprep.subr.mxu0 0.0
    %548 = vmatpush1.xpose.msra.mxu0 0.0
    %549 = vmatprep.subr.mxu0 0.0
    %550 = vmatpush1.xpose.msra.mxu0 0.0
    %551 = vmatprep.subr.mxu0 0.0
    %552 = vmatpush1.xpose.msra.mxu0 0.0
    %553 = vmatprep.subr.mxu0 0.0
    %554 = vmatpush1.xpose.msra.mxu0 0.0
    %555 = vmatprep.subr.mxu0 0.0
    %556 = vmatpush1.xpose.msra.mxu0 0.0
    %557 = vmatprep.subr.mxu0 0.0
    %558 = vmatpush1.xpose.msra.mxu0 0.0
    %559 = vmatprep.subr.mxu0 0.0
    %560 = vmatpush1.xpose.msra.mxu0 0.0
    %561 = vmatprep.subr.mxu0 0.0
    %562 = vmatpush1.xpose.msra.mxu0 0.0
    %563 = vmatprep.subr.mxu0 0.0
    %564 = vmatpush1.xpose.msra.mxu0 0.0
    %565 = vmatprep.subr.mxu0 0.0
    %566 = vmatpush1.xpose.msra.mxu0 0.0
    %567 = vmatprep.subr.mxu0 0.0
    %568 = vmatpush1.xpose.msra.mxu0 0.0
    %569 = vmatprep.subr.mxu0 0.0
    %570 = vmatpush1.xpose.msra.mxu0 0.0
    %571 = vmatprep.subr.mxu0 0.0
    %572 = vmatpush1.xpose.msra.mxu0 0.0
    %573 = vmatprep.subr.mxu0 0.0
    %574 = vmatpush1.xpose.msra.mxu0 0.0
    %575 = vmatprep.subr.mxu0 0.0
    %576 = vmatpush1.xpose.msra.mxu0 0.0
    %577 = vmatprep.subr.mxu0 0.0
    %578 = vmatpush1.xpose.msra.mxu0 0.0
    %579 = vmatprep.subr.mxu0 0.0
    %580 = vmatpush1.xpose.msra.mxu0 0.0
    %581 = vmatprep.subr.mxu0 0.0
    %582 = vmatpush1.xpose.msra.mxu0 0.0
    %583 = vmatprep.subr.mxu0 0.0
    %584 = vmatpush1.xpose.msra.mxu0 0.0
    %585 = vmatprep.subr.mxu0 0.0
    %586 = vmatpush1.xpose.msra.mxu0 0.0
    %587 = vmatprep.subr.mxu0 0.0
    %588 = vmatpush1.xpose.msra.mxu0 0.0
    %589 = vmatprep.subr.mxu0 0.0
    %590 = vmatpush1.xpose.msra.mxu0 0.0
    %591 = vmatprep.subr.mxu0 0.0
    %592 = vmatpush1.xpose.msra.mxu0 0.0
    %593 = vmatprep.subr.mxu0 0.0
    %594 = vmatpush1.xpose.msra.mxu0 0.0
    %595 = vmatprep.subr.mxu0 0.0
    %596 = vmatpush1.xpose.msra.mxu0 0.0
    %597 = vmatprep.subr.mxu0 0.0
    %598 = vmatpush1.xpose.msra.mxu0 0.0
    %599 = vmatprep.subr.mxu0 0.0
    %600 = vmatpush1.xpose.msra.mxu0 0.0
    %601 = vmatprep.mubr.f32.mxu0 0.0
    %602 = vmatmul.mubr.f32.gmra.mrb[0].mxu0 %v529
    %v603 = vpop.f32.mrb[0].mxu0
    %v604 = vadd.f32 0.0, %v603
    %v605 = vpop.f32.mrb[0].mxu0
    %606 = vmatprep.mubr.f32.mxu0 0.0
    %607 = vmatmul.mubr.f32.gmra.mrb[0].mxu0 %v531
    %v608 = vpop.f32.mrb[0].mxu0
    %v609 = vadd.f32 0.0, %v608
    %v610 = vpop.f32.mrb[0].mxu0
    %611 = vdwg.mxu0
    %614 = vrot.lane.b32.xlu0 %v344, 112
    %v615 = vpop.permute.xlu0 %614
    %616 = vrot.lane.b32.xlu0 %v349, 112
    %v617 = vpop.permute.xlu0 %616
    %v618 = vsel %vm439, %v344, 0
    %v620 = vsel %vm439, %v349, 0
    %v622 = vsel %vm439, %v615, 0
    %v624 = vsel %vm439, %v617, 0
    %626 = vmatprep.subr.mxu0 0.0
    %627 = vmatpush1.xpose.msra.mxu0 %v622
    %628 = vmatprep.subr.mxu0 0.0
    %629 = vmatpush1.xpose.msra.mxu0 %v624
    %630 = vmatprep.subr.mxu0 0.0
    %631 = vmatpush1.xpose.msra.mxu0 0.0
    %632 = vmatprep.subr.mxu0 0.0
    %633 = vmatpush1.xpose.msra.mxu0 0.0
    %634 = vmatprep.subr.mxu0 0.0
    %635 = vmatpush1.xpose.msra.mxu0 0.0
    %636 = vmatprep.subr.mxu0 0.0
    %637 = vmatpush1.xpose.msra.mxu0 0.0
    %638 = vmatprep.subr.mxu0 0.0
    %639 = vmatpush1.xpose.msra.mxu0 0.0
    %640 = vmatprep.subr.mxu0 0.0
    %641 = vmatpush1.xpose.msra.mxu0 0.0
    %642 = vmatprep.subr.mxu0 0.0
    %643 = vmatpush1.xpose.msra.mxu0 0.0
    %644 = vmatprep.subr.mxu0 0.0
    %645 = vmatpush1.xpose.msra.mxu0 0.0
    %646 = vmatprep.subr.mxu0 0.0
    %647 = vmatpush1.xpose.msra.mxu0 0.0
    %648 = vmatprep.subr.mxu0 0.0
    %649 = vmatpush1.xpose.msra.mxu0 0.0
    %650 = vmatprep.subr.mxu0 0.0
    %651 = vmatpush1.xpose.msra.mxu0 0.0
    %652 = vmatprep.subr.mxu0 0.0
    %653 = vmatpush1.xpose.msra.mxu0 0.0
    %654 = vmatprep.subr.mxu0 0.0
    %655 = vmatpush1.xpose.msra.mxu0 0.0
    %656 = vmatprep.subr.mxu0 0.0
    %657 = vmatpush1.xpose.msra.mxu0 0.0
    %658 = vmatprep.subr.mxu0 0.0
    %659 = vmatpush1.xpose.msra.mxu0 0.0
    %660 = vmatprep.subr.mxu0 0.0
    %661 = vmatpush1.xpose.msra.mxu0 0.0
    %662 = vmatprep.subr.mxu0 0.0
    %663 = vmatpush1.xpose.msra.mxu0 0.0
    %664 = vmatprep.subr.mxu0 0.0
    %665 = vmatpush1.xpose.msra.mxu0 0.0
    %666 = vmatprep.subr.mxu0 0.0
    %667 = vmatpush1.xpose.msra.mxu0 0.0
    %668 = vmatprep.subr.mxu0 0.0
    %669 = vmatpush1.xpose.msra.mxu0 0.0
    %670 = vmatprep.subr.mxu0 0.0
    %671 = vmatpush1.xpose.msra.mxu0 0.0
    %672 = vmatprep.subr.mxu0 0.0
    %673 = vmatpush1.xpose.msra.mxu0 0.0
    %674 = vmatprep.subr.mxu0 0.0
    %675 = vmatpush1.xpose.msra.mxu0 0.0
    %676 = vmatprep.subr.mxu0 0.0
    %677 = vmatpush1.xpose.msra.mxu0 0.0
    %678 = vmatprep.subr.mxu0 0.0
    %679 = vmatpush1.xpose.msra.mxu0 0.0
    %680 = vmatprep.subr.mxu0 0.0
    %681 = vmatpush1.xpose.msra.mxu0 0.0
    %682 = vmatprep.subr.mxu0 0.0
    %683 = vmatpush1.xpose.msra.mxu0 0.0
    %684 = vmatprep.subr.mxu0 0.0
    %685 = vmatpush1.xpose.msra.mxu0 0.0
    %686 = vmatprep.subr.mxu0 0.0
    %687 = vmatpush1.xpose.msra.mxu0 0.0
    %688 = vmatprep.subr.mxu0 0.0
    %689 = vmatpush1.xpose.msra.mxu0 0.0
    %690 = vmatprep.mubr.f32.mxu0 0.0
    %691 = vmatmul.mubr.f32.gmra.mrb[0].mxu0 %v618
    %v692 = vpop.f32.mrb[0].mxu0
    %v693 = vadd.f32 0.0, %v692
    %v694 = vpop.f32.mrb[0].mxu0
    %695 = vmatprep.mubr.f32.mxu0 0.0
    %696 = vmatmul.mubr.f32.gmra.mrb[0].mxu0 %v620
    %v697 = vpop.f32.mrb[0].mxu0
    %v698 = vadd.f32 0.0, %v697
    %v699 = vpop.f32.mrb[0].mxu0
    %700 = vdwg.mxu0
    %703 = vrot.lane.b32.xlu0 %v425, 112
    %v704 = vpop.permute.xlu0 %703
    %705 = vrot.lane.b32.xlu0 %v430, 112
    %v706 = vpop.permute.xlu0 %705
    %v707 = vsel %vm439, %v425, 0
    %v709 = vsel %vm439, %v430, 0
    %v711 = vsel %vm439, %v704, 0
    %v713 = vsel %vm439, %v706, 0
    %715 = vmatprep.subr.mxu0 0.0
    %716 = vmatpush1.xpose.msra.mxu0 %v711
    %717 = vmatprep.subr.mxu0 0.0
    %718 = vmatpush1.xpose.msra.mxu0 %v713
    %719 = vmatprep.subr.mxu0 0.0
    %720 = vmatpush1.xpose.msra.mxu0 0.0
    %721 = vmatprep.subr.mxu0 0.0
    %722 = vmatpush1.xpose.msra.mxu0 0.0
    %723 = vmatprep.subr.mxu0 0.0
    %724 = vmatpush1.xpose.msra.mxu0 0.0
    %725 = vmatprep.subr.mxu0 0.0
    %726 = vmatpush1.xpose.msra.mxu0 0.0
    %727 = vmatprep.subr.mxu0 0.0
    %728 = vmatpush1.xpose.msra.mxu0 0.0
    %729 = vmatprep.subr.mxu0 0.0
    %730 = vmatpush1.xpose.msra.mxu0 0.0
    %731 = vmatprep.subr.mxu0 0.0
    %732 = vmatpush1.xpose.msra.mxu0 0.0
    %733 = vmatprep.subr.mxu0 0.0
    %734 = vmatpush1.xpose.msra.mxu0 0.0
    %735 = vmatprep.subr.mxu0 0.0
    %736 = vmatpush1.xpose.msra.mxu0 0.0
    %737 = vmatprep.subr.mxu0 0.0
    %738 = vmatpush1.xpose.msra.mxu0 0.0
    %739 = vmatprep.subr.mxu0 0.0
    %740 = vmatpush1.xpose.msra.mxu0 0.0
    %741 = vmatprep.subr.mxu0 0.0
    %742 = vmatpush1.xpose.msra.mxu0 0.0
    %743 = vmatprep.subr.mxu0 0.0
    %744 = vmatpush1.xpose.msra.mxu0 0.0
    %745 = vmatprep.subr.mxu0 0.0
    %746 = vmatpush1.xpose.msra.mxu0 0.0
    %747 = vmatprep.subr.mxu0 0.0
    %748 = vmatpush1.xpose.msra.mxu0 0.0
    %749 = vmatprep.subr.mxu0 0.0
    %750 = vmatpush1.xpose.msra.mxu0 0.0
    %751 = vmatprep.subr.mxu0 0.0
    %752 = vmatpush1.xpose.msra.mxu0 0.0
    %753 = vmatprep.subr.mxu0 0.0
    %754 = vmatpush1.xpose.msra.mxu0 0.0
    %755 = vmatprep.subr.mxu0 0.0
    %756 = vmatpush1.xpose.msra.mxu0 0.0
    %757 = vmatprep.subr.mxu0 0.0
    %758 = vmatpush1.xpose.msra.mxu0 0.0
    %759 = vmatprep.subr.mxu0 0.0
    %760 = vmatpush1.xpose.msra.mxu0 0.0
    %761 = vmatprep.subr.mxu0 0.0
    %762 = vmatpush1.xpose.msra.mxu0 0.0
    %763 = vmatprep.subr.mxu0 0.0
    %764 = vmatpush1.xpose.msra.mxu0 0.0
    %765 = vmatprep.subr.mxu0 0.0
    %766 = vmatpush1.xpose.msra.mxu0 0.0
    %767 = vmatprep.subr.mxu0 0.0
    %768 = vmatpush1.xpose.msra.mxu0 0.0
    %769 = vmatprep.subr.mxu0 0.0
    %770 = vmatpush1.xpose.msra.mxu0 0.0
    %771 = vmatprep.subr.mxu0 0.0
    %772 = vmatpush1.xpose.msra.mxu0 0.0
    %773 = vmatprep.subr.mxu0 0.0
    %774 = vmatpush1.xpose.msra.mxu0 0.0
    %775 = vmatprep.subr.mxu0 0.0
    %776 = vmatpush1.xpose.msra.mxu0 0.0
    %777 = vmatprep.subr.mxu0 0.0
    %778 = vmatpush1.xpose.msra.mxu0 0.0
    %779 = vmatprep.mubr.f32.mxu0 0.0
    %780 = vmatmul.mubr.f32.gmra.mrb[0].mxu0 %v707
    %v781 = vpop.f32.mrb[0].mxu0
    %v782 = vadd.f32 0.0, %v781
    %v783 = vpop.f32.mrb[0].mxu0
    %784 = vmatprep.mubr.f32.mxu0 0.0
    %785 = vmatmul.mubr.f32.gmra.mrb[0].mxu0 %v709
    %v786 = vpop.f32.mrb[0].mxu0
    %v787 = vadd.f32 0.0, %v786
    %v788 = vpop.f32.mrb[0].mxu0
    %789 = vdwg.mxu0
    %v790 = vmul.f32 %v515, 0.25
    %v791 = vmul.f32 %v520, 0.25
    %v792 = vmul.f32 %v604, 0.25
    %v793 = vmul.f32 %v609, 0.25
    %v794 = vmul.f32 %v693, 0.25
    %v795 = vmul.f32 %v698, 0.25
    %v796 = vmul.f32 %v782, 0.25
    %v797 = vmul.f32 %v787, 0.25
    %v798 = vlaneseq
    %v799 = vshrl.u32 %v798, 7
    %v800 = vadd.s32 %v799, 8
    %v801 = vlaneseq
    %v802 = vand.u32 %v801, 127
    %vm803 = vcmp.le.s32.totalorder %v802, %v799
    %vm804 = vcmp.le.s32.totalorder %v802, %v800
    %v805 = vsel %vm803, 1, 0
    %v806 = vsel %vm804, 1, 0
    %vm807 = vcmp.eq.s32.totalorder %v805, 1
    %vm808 = vcmp.eq.s32.totalorder %v806, 1
    %v809 = vsel %vm807, %v790, -1e+30
    %v810 = vsel %vm808, %v791, -1e+30
    %v811 = vsel %vm807, %v792, -1e+30
    %v812 = vsel %vm808, %v793, -1e+30
    %v813 = vsel %vm807, %v794, -1e+30
    %v814 = vsel %vm808, %v795, -1e+30
    %v815 = vsel %vm807, %v796, -1e+30
    %v816 = vsel %vm808, %v797, -1e+30
    %v817 = vsel %vm439, %v809, -inf
    %818 = vmax.xlane.f32.xlu0 %v817
    %v819 = vpop.xlane.xlu0 %818
    %v820 = vsel %vm439, %v810, -inf
    %821 = vmax.xlane.f32.xlu0 %v820
    %v822 = vpop.xlane.xlu0 %821
    %v823 = vsel %vm439, %v811, -inf
    %824 = vmax.xlane.f32.xlu0 %v823
    %v825 = vpop.xlane.xlu0 %824
    %v826 = vsel %vm439, %v812, -inf
    %827 = vmax.xlane.f32.xlu0 %v826
    %v828 = vpop.xlane.xlu0 %827
    %v829 = vsel %vm439, %v813, -inf
    %830 = vmax.xlane.f32.xlu0 %v829
    %v831 = vpop.xlane.xlu0 %830
    %v832 = vsel %vm439, %v814, -inf
    %833 = vmax.xlane.f32.xlu0 %v832
    %v834 = vpop.xlane.xlu0 %833
    %v835 = vsel %vm439, %v815, -inf
    %836 = vmax.xlane.f32.xlu0 %v835
    %v837 = vpop.xlane.xlu0 %836
    %v838 = vsel %vm439, %v816, -inf
    %839 = vmax.xlane.f32.xlu0 %v838
    %v840 = vpop.xlane.xlu0 %839
    %v841 = vsub.f32 %v809, %v819
    %v842 = vsub.f32 %v810, %v822
    %v843 = vsub.f32 %v811, %v825
    %v844 = vsub.f32 %v812, %v828
    %v845 = vsub.f32 %v813, %v831
    %v846 = vsub.f32 %v814, %v834
    %v847 = vsub.f32 %v815, %v837
    %v848 = vsub.f32 %v816, %v840
    %v849 = vmul.f32 %v841, 1.442695
    %v850 = vpow.pop %v849
    %v851 = vmul.f32 %v842, 1.442695
    %v852 = vpow.pop %v851
    %v853 = vmul.f32 %v843, 1.442695
    %v854 = vpow.pop %v853
    %v855 = vmul.f32 %v844, 1.442695
    %v856 = vpow.pop %v855
    %v857 = vmul.f32 %v845, 1.442695
    %v858 = vpow.pop %v857
    %v859 = vmul.f32 %v846, 1.442695
    %v860 = vpow.pop %v859
    %v861 = vmul.f32 %v847, 1.442695
    %v862 = vpow.pop %v861
    %v863 = vmul.f32 %v848, 1.442695
    %v864 = vpow.pop %v863
    %v865 = vsel %vm439, %v850, 0.0
    %866 = vadd.xlane.f32.xlu0 %v865
    %v867 = vpop.xlane.xlu0 %866
    %v868 = vsel %vm439, %v852, 0.0
    %869 = vadd.xlane.f32.xlu0 %v868
    %v870 = vpop.xlane.xlu0 %869
    %v871 = vsel %vm439, %v854, 0.0
    %872 = vadd.xlane.f32.xlu0 %v871
    %v873 = vpop.xlane.xlu0 %872
    %v874 = vsel %vm439, %v856, 0.0
    %875 = vadd.xlane.f32.xlu0 %v874
    %v876 = vpop.xlane.xlu0 %875
    %v877 = vsel %vm439, %v858, 0.0
    %878 = vadd.xlane.f32.xlu0 %v877
    %v879 = vpop.xlane.xlu0 %878
    %v880 = vsel %vm439, %v860, 0.0
    %881 = vadd.xlane.f32.xlu0 %v880
    %v882 = vpop.xlane.xlu0 %881
    %v883 = vsel %vm439, %v862, 0.0
    %884 = vadd.xlane.f32.xlu0 %v883
    %v885 = vpop.xlane.xlu0 %884
    %v886 = vsel %vm439, %v864, 0.0
    %887 = vadd.xlane.f32.xlu0 %v886
    %v888 = vpop.xlane.xlu0 %887
    %v889 = vrcp.pop %v867
    %v890 = vmul.f32 %v850, %v889
    %v891 = vrcp.pop %v870
    %v892 = vmul.f32 %v852, %v891
    %v893 = vrcp.pop %v873
    %v894 = vmul.f32 %v854, %v893
    %v895 = vrcp.pop %v876
    %v896 = vmul.f32 %v856, %v895
    %v897 = vrcp.pop %v879
    %v898 = vmul.f32 %v858, %v897
    %v899 = vrcp.pop %v882
    %v900 = vmul.f32 %v860, %v899
    %v901 = vrcp.pop %v885
    %v902 = vmul.f32 %v862, %v901
    %v903 = vrcp.pop %v888
    %v904 = vmul.f32 %v864, %v903
    %905 = vrot.lane.b32.xlu0 %v182, 96
    %v906 = vpop.permute.xlu0 %905
    %907 = vrot.lane.b32.xlu0 %v187, 96
    %v908 = vpop.permute.xlu0 %907
    %v912 = vsel %vm439, %v890, 0
    %v915 = vsel %vm439, %v892, 0
    %917 = vmatprep.subr.mxu0 0.0
    %918 = vmatpush1.msra.mxu0 %v906
    %919 = vmatprep.subr.mxu0 0.0
    %920 = vmatpush1.msra.mxu0 %v908
    %921 = vmatprep.subr.mxu0 0.0
    %922 = vmatpush1.msra.mxu0 0.0
    %923 = vmatprep.subr.mxu0 0.0
    %924 = vmatpush1.msra.mxu0 0.0
    %925 = vmatprep.subr.mxu0 0.0
    %926 = vmatpush1.msra.mxu0 0.0
    %927 = vmatprep.subr.mxu0 0.0
    %928 = vmatpush1.msra.mxu0 0.0
    %929 = vmatprep.subr.mxu0 0.0
    %930 = vmatpush1.msra.mxu0 0.0
    %931 = vmatprep.subr.mxu0 0.0
    %932 = vmatpush1.msra.mxu0 0.0
    %933 = vmatprep.subr.mxu0 0.0
    %934 = vmatpush1.msra.mxu0 0.0
    %935 = vmatprep.subr.mxu0 0.0
    %936 = vmatpush1.msra.mxu0 0.0
    %937 = vmatprep.subr.mxu0 0.0
    %938 = vmatpush1.msra.mxu0 0.0
    %939 = vmatprep.subr.mxu0 0.0
    %940 = vmatpush1.msra.mxu0 0.0
    %941 = vmatprep.subr.mxu0 0.0
    %942 = vmatpush1.msra.mxu0 0.0
    %943 = vmatprep.subr.mxu0 0.0
    %944 = vmatpush1.msra.mxu0 0.0
    %945 = vmatprep.subr.mxu0 0.0
    %946 = vmatpush1.msra.mxu0 0.0
    %947 = vmatprep.subr.mxu0 0.0
    %948 = vmatpush1.msra.mxu0 0.0
    %949 = vmatprep.subr.mxu0 0.0
    %950 = vmatpush1.msra.mxu0 0.0
    %951 = vmatprep.subr.mxu0 0.0
    %952 = vmatpush1.msra.mxu0 0.0
    %953 = vmatprep.subr.mxu0 0.0
    %954 = vmatpush1.msra.mxu0 0.0
    %955 = vmatprep.subr.mxu0 0.0
    %956 = vmatpush1.msra.mxu0 0.0
    %957 = vmatprep.subr.mxu0 0.0
    %958 = vmatpush1.msra.mxu0 0.0
    %959 = vmatprep.subr.mxu0 0.0
    %960 = vmatpush1.msra.mxu0 0.0
    %961 = vmatprep.subr.mxu0 0.0
    %962 = vmatpush1.msra.mxu0 0.0
    %963 = vmatprep.subr.mxu0 0.0
    %964 = vmatpush1.msra.mxu0 0.0
    %965 = vmatprep.subr.mxu0 0.0
    %966 = vmatpush1.msra.mxu0 0.0
    %967 = vmatprep.subr.mxu0 0.0
    %968 = vmatpush1.msra.mxu0 0.0
    %969 = vmatprep.subr.mxu0 0.0
    %970 = vmatpush1.msra.mxu0 0.0
    %971 = vmatprep.subr.mxu0 0.0
    %972 = vmatpush1.msra.mxu0 0.0
    %973 = vmatprep.subr.mxu0 0.0
    %974 = vmatpush1.msra.mxu0 0.0
    %975 = vmatprep.subr.mxu0 0.0
    %976 = vmatpush1.msra.mxu0 0.0
    %977 = vmatprep.subr.mxu0 0.0
    %978 = vmatpush1.msra.mxu0 0.0
    %979 = vmatprep.subr.mxu0 0.0
    %980 = vmatpush1.msra.mxu0 0.0
    %981 = vmatprep.mubr.f32.mxu0 0.0
    %982 = vmatmul.mubr.f32.gmra.mrb[0].mxu0 %v912
    %v983 = vpop.f32.mrb[0].mxu0
    %v984 = vadd.f32 0.0, %v983
    %v985 = vpop.f32.mrb[0].mxu0
    %986 = vmatprep.mubr.f32.mxu0 0.0
    %987 = vmatmul.mubr.f32.gmra.mrb[0].mxu0 %v915
    %v988 = vpop.f32.mrb[0].mxu0
    %v989 = vadd.f32 0.0, %v988
    %v990 = vpop.f32.mrb[0].mxu0
    %991 = vdwg.mxu0
    %992 = vrot.lane.b32.xlu0 %v263, 96
    %v993 = vpop.permute.xlu0 %992
    %994 = vrot.lane.b32.xlu0 %v268, 96
    %v995 = vpop.permute.xlu0 %994
    %v999 = vsel %vm439, %v894, 0
    %v1002 = vsel %vm439, %v896, 0
    %1004 = vmatprep.subr.mxu0 0.0
    %1005 = vmatpush1.msra.mxu0 %v993
    %1006 = vmatprep.subr.mxu0 0.0
    %1007 = vmatpush1.msra.mxu0 %v995
    %1008 = vmatprep.subr.mxu0 0.0
    %1009 = vmatpush1.msra.mxu0 0.0
    %1010 = vmatprep.subr.mxu0 0.0
    %1011 = vmatpush1.msra.mxu0 0.0
    %1012 = vmatprep.subr.mxu0 0.0
    %1013 = vmatpush1.msra.mxu0 0.0
    %1014 = vmatprep.subr.mxu0 0.0
    %1015 = vmatpush1.msra.mxu0 0.0
    %1016 = vmatprep.subr.mxu0 0.0
    %1017 = vmatpush1.msra.mxu0 0.0
    %1018 = vmatprep.subr.mxu0 0.0
    %1019 = vmatpush1.msra.mxu0 0.0
    %1020 = vmatprep.subr.mxu0 0.0
    %1021 = vmatpush1.msra.mxu0 0.0
    %1022 = vmatprep.subr.mxu0 0.0
    %1023 = vmatpush1.msra.mxu0 0.0
    %1024 = vmatprep.subr.mxu0 0.0
    %1025 = vmatpush1.msra.mxu0 0.0
    %1026 = vmatprep.subr.mxu0 0.0
    %1027 = vmatpush1.msra.mxu0 0.0
    %1028 = vmatprep.subr.mxu0 0.0
    %1029 = vmatpush1.msra.mxu0 0.0
    %1030 = vmatprep.subr.mxu0 0.0
    %1031 = vmatpush1.msra.mxu0 0.0
    %1032 = vmatprep.subr.mxu0 0.0
    %1033 = vmatpush1.msra.mxu0 0.0
    %1034 = vmatprep.subr.mxu0 0.0
    %1035 = vmatpush1.msra.mxu0 0.0
    %1036 = vmatprep.subr.mxu0 0.0
    %1037 = vmatpush1.msra.mxu0 0.0
    %1038 = vmatprep.subr.mxu0 0.0
    %1039 = vmatpush1.msra.mxu0 0.0
    %1040 = vmatprep.subr.mxu0 0.0
    %1041 = vmatpush1.msra.mxu0 0.0
    %1042 = vmatprep.subr.mxu0 0.0
    %1043 = vmatpush1.msra.mxu0 0.0
    %1044 = vmatprep.subr.mxu0 0.0
    %1045 = vmatpush1.msra.mxu0 0.0
    %1046 = vmatprep.subr.mxu0 0.0
    %1047 = vmatpush1.msra.mxu0 0.0
    %1048 = vmatprep.subr.mxu0 0.0
    %1049 = vmatpush1.msra.mxu0 0.0
    %1050 = vmatprep.subr.mxu0 0.0
    %1051 = vmatpush1.msra.mxu0 0.0
    %1052 = vmatprep.subr.mxu0 0.0
    %1053 = vmatpush1.msra.mxu0 0.0
    %1054 = vmatprep.subr.mxu0 0.0
    %1055 = vmatpush1.msra.mxu0 0.0
    %1056 = vmatprep.subr.mxu0 0.0
    %1057 = vmatpush1.msra.mxu0 0.0
    %1058 = vmatprep.subr.mxu0 0.0
    %1059 = vmatpush1.msra.mxu0 0.0
    %1060 = vmatprep.subr.mxu0 0.0
    %1061 = vmatpush1.msra.mxu0 0.0
    %1062 = vmatprep.subr.mxu0 0.0
    %1063 = vmatpush1.msra.mxu0 0.0
    %1064 = vmatprep.subr.mxu0 0.0
    %1065 = vmatpush1.msra.mxu0 0.0
    %1066 = vmatprep.subr.mxu0 0.0
    %1067 = vmatpush1.msra.mxu0 0.0
    %1068 = vmatprep.mubr.f32.mxu0 0.0
    %1069 = vmatmul.mubr.f32.gmra.mrb[0].mxu0 %v999
    %v1070 = vpop.f32.mrb[0].mxu0
    %v1071 = vadd.f32 0.0, %v1070
    %v1072 = vpop.f32.mrb[0].mxu0
    %1073 = vmatprep.mubr.f32.mxu0 0.0
    %1074 = vmatmul.mubr.f32.gmra.mrb[0].mxu0 %v1002
    %v1075 = vpop.f32.mrb[0].mxu0
    %v1076 = vadd.f32 0.0, %v1075
    %v1077 = vpop.f32.mrb[0].mxu0
    %1078 = vdwg.mxu0
    %1079 = vrot.lane.b32.xlu0 %v344, 96
    %v1080 = vpop.permute.xlu0 %1079
    %1081 = vrot.lane.b32.xlu0 %v349, 96
    %v1082 = vpop.permute.xlu0 %1081
    %v1086 = vsel %vm439, %v898, 0
    %v1089 = vsel %vm439, %v900, 0
    %1091 = vmatprep.subr.mxu0 0.0
    %1092 = vmatpush1.msra.mxu0 %v1080
    %1093 = vmatprep.subr.mxu0 0.0
    %1094 = vmatpush1.msra.mxu0 %v1082
    %1095 = vmatprep.subr.mxu0 0.0
    %1096 = vmatpush1.msra.mxu0 0.0
    %1097 = vmatprep.subr.mxu0 0.0
    %1098 = vmatpush1.msra.mxu0 0.0
    %1099 = vmatprep.subr.mxu0 0.0
    %1100 = vmatpush1.msra.mxu0 0.0
    %1101 = vmatprep.subr.mxu0 0.0
    %1102 = vmatpush1.msra.mxu0 0.0
    %1103 = vmatprep.subr.mxu0 0.0
    %1104 = vmatpush1.msra.mxu0 0.0
    %1105 = vmatprep.subr.mxu0 0.0
    %1106 = vmatpush1.msra.mxu0 0.0
    %1107 = vmatprep.subr.mxu0 0.0
    %1108 = vmatpush1.msra.mxu0 0.0
    %1109 = vmatprep.subr.mxu0 0.0
    %1110 = vmatpush1.msra.mxu0 0.0
    %1111 = vmatprep.subr.mxu0 0.0
    %1112 = vmatpush1.msra.mxu0 0.0
    %1113 = vmatprep.subr.mxu0 0.0
    %1114 = vmatpush1.msra.mxu0 0.0
    %1115 = vmatprep.subr.mxu0 0.0
    %1116 = vmatpush1.msra.mxu0 0.0
    %1117 = vmatprep.subr.mxu0 0.0
    %1118 = vmatpush1.msra.mxu0 0.0
    %1119 = vmatprep.subr.mxu0 0.0
    %1120 = vmatpush1.msra.mxu0 0.0
    %1121 = vmatprep.subr.mxu0 0.0
    %1122 = vmatpush1.msra.mxu0 0.0
    %1123 = vmatprep.subr.mxu0 0.0
    %1124 = vmatpush1.msra.mxu0 0.0
    %1125 = vmatprep.subr.mxu0 0.0
    %1126 = vmatpush1.msra.mxu0 0.0
    %1127 = vmatprep.subr.mxu0 0.0
    %1128 = vmatpush1.msra.mxu0 0.0
    %1129 = vmatprep.subr.mxu0 0.0
    %1130 = vmatpush1.msra.mxu0 0.0
    %1131 = vmatprep.subr.mxu0 0.0
    %1132 = vmatpush1.msra.mxu0 0.0
    %1133 = vmatprep.subr.mxu0 0.0
    %1134 = vmatpush1.msra.mxu0 0.0
    %1135 = vmatprep.subr.mxu0 0.0
    %1136 = vmatpush1.msra.mxu0 0.0
    %1137 = vmatprep.subr.mxu0 0.0
    %1138 = vmatpush1.msra.mxu0 0.0
    %1139 = vmatprep.subr.mxu0 0.0
    %1140 = vmatpush1.msra.mxu0 0.0
    %1141 = vmatprep.subr.mxu0 0.0
    %1142 = vmatpush1.msra.mxu0 0.0
    %1143 = vmatprep.subr.mxu0 0.0
    %1144 = vmatpush1.msra.mxu0 0.0
    %1145 = vmatprep.subr.mxu0 0.0
    %1146 = vmatpush1.msra.mxu0 0.0
    %1147 = vmatprep.subr.mxu0 0.0
    %1148 = vmatpush1.msra.mxu0 0.0
    %1149 = vmatprep.subr.mxu0 0.0
    %1150 = vmatpush1.msra.mxu0 0.0
    %1151 = vmatprep.subr.mxu0 0.0
    %1152 = vmatpush1.msra.mxu0 0.0
    %1153 = vmatprep.subr.mxu0 0.0
    %1154 = vmatpush1.msra.mxu0 0.0
    %1155 = vmatprep.mubr.f32.mxu0 0.0
    %1156 = vmatmul.mubr.f32.gmra.mrb[0].mxu0 %v1086
    %v1157 = vpop.f32.mrb[0].mxu0
    %v1158 = vadd.f32 0.0, %v1157
    %v1159 = vpop.f32.mrb[0].mxu0
    %1160 = vmatprep.mubr.f32.mxu0 0.0
    %1161 = vmatmul.mubr.f32.gmra.mrb[0].mxu0 %v1089
    %v1162 = vpop.f32.mrb[0].mxu0
    %v1163 = vadd.f32 0.0, %v1162
    %v1164 = vpop.f32.mrb[0].mxu0
    %1165 = vdwg.mxu0
    %1166 = vrot.lane.b32.xlu0 %v425, 96
    %v1167 = vpop.permute.xlu0 %1166
    %1168 = vrot.lane.b32.xlu0 %v430, 96
    %v1169 = vpop.permute.xlu0 %1168
    %v1173 = vsel %vm439, %v902, 0
    %v1176 = vsel %vm439, %v904, 0
    %1178 = vmatprep.subr.mxu0 0.0
    %1179 = vmatpush1.msra.mxu0 %v1167
    %1180 = vmatprep.subr.mxu0 0.0
    %1181 = vmatpush1.msra.mxu0 %v1169
    %1182 = vmatprep.subr.mxu0 0.0
    %1183 = vmatpush1.msra.mxu0 0.0
    %1184 = vmatprep.subr.mxu0 0.0
    %1185 = vmatpush1.msra.mxu0 0.0
    %1186 = vmatprep.subr.mxu0 0.0
    %1187 = vmatpush1.msra.mxu0 0.0
    %1188 = vmatprep.subr.mxu0 0.0
    %1189 = vmatpush1.msra.mxu0 0.0
    %1190 = vmatprep.subr.mxu0 0.0
    %1191 = vmatpush1.msra.mxu0 0.0
    %1192 = vmatprep.subr.mxu0 0.0
    %1193 = vmatpush1.msra.mxu0 0.0
    %1194 = vmatprep.subr.mxu0 0.0
    %1195 = vmatpush1.msra.mxu0 0.0
    %1196 = vmatprep.subr.mxu0 0.0
    %1197 = vmatpush1.msra.mxu0 0.0
    %1198 = vmatprep.subr.mxu0 0.0
    %1199 = vmatpush1.msra.mxu0 0.0
    %1200 = vmatprep.subr.mxu0 0.0
    %1201 = vmatpush1.msra.mxu0 0.0
    %1202 = vmatprep.subr.mxu0 0.0
    %1203 = vmatpush1.msra.mxu0 0.0
    %1204 = vmatprep.subr.mxu0 0.0
    %1205 = vmatpush1.msra.mxu0 0.0
    %1206 = vmatprep.subr.mxu0 0.0
    %1207 = vmatpush1.msra.mxu0 0.0
    %1208 = vmatprep.subr.mxu0 0.0
    %1209 = vmatpush1.msra.mxu0 0.0
    %1210 = vmatprep.subr.mxu0 0.0
    %1211 = vmatpush1.msra.mxu0 0.0
    %1212 = vmatprep.subr.mxu0 0.0
    %1213 = vmatpush1.msra.mxu0 0.0
    %1214 = vmatprep.subr.mxu0 0.0
    %1215 = vmatpush1.msra.mxu0 0.0
    %1216 = vmatprep.subr.mxu0 0.0
    %1217 = vmatpush1.msra.mxu0 0.0
    %1218 = vmatprep.subr.mxu0 0.0
    %1219 = vmatpush1.msra.mxu0 0.0
    %1220 = vmatprep.subr.mxu0 0.0
    %1221 = vmatpush1.msra.mxu0 0.0
    %1222 = vmatprep.subr.mxu0 0.0
    %1223 = vmatpush1.msra.mxu0 0.0
    %1224 = vmatprep.subr.mxu0 0.0
    %1225 = vmatpush1.msra.mxu0 0.0
    %1226 = vmatprep.subr.mxu0 0.0
    %1227 = vmatpush1.msra.mxu0 0.0
    %1228 = vmatprep.subr.mxu0 0.0
    %1229 = vmatpush1.msra.mxu0 0.0
    %1230 = vmatprep.subr.mxu0 0.0
    %1231 = vmatpush1.msra.mxu0 0.0
    %1232 = vmatprep.subr.mxu0 0.0
    %1233 = vmatpush1.msra.mxu0 0.0
    %1234 = vmatprep.subr.mxu0 0.0
    %1235 = vmatpush1.msra.mxu0 0.0
    %1236 = vmatprep.subr.mxu0 0.0
    %1237 = vmatpush1.msra.mxu0 0.0
    %1238 = vmatprep.subr.mxu0 0.0
    %1239 = vmatpush1.msra.mxu0 0.0
    %1240 = vmatprep.subr.mxu0 0.0
    %1241 = vmatpush1.msra.mxu0 0.0
    %1242 = vmatprep.mubr.f32.mxu0 0.0
    %1243 = vmatmul.mubr.f32.gmra.mrb[0].mxu0 %v1173
    %v1244 = vpop.f32.mrb[0].mxu0
    %v1245 = vadd.f32 0.0, %v1244
    %v1246 = vpop.f32.mrb[0].mxu0
    %1247 = vmatprep.mubr.f32.mxu0 0.0
    %1248 = vmatmul.mubr.f32.gmra.mrb[0].mxu0 %v1176
    %v1249 = vpop.f32.mrb[0].mxu0
    %v1250 = vadd.f32 0.0, %v1249
    %v1251 = vpop.f32.mrb[0].mxu0
    %1252 = vdwg.mxu0
    %v1253 = vld [vmem:[#allocation8] sm:$0xff]
    %v1254 = vld [vmem:[#allocation8 + $0x8] sm:$0xff]
    %v1255 = vld [vmem:[#allocation8 + $0x10] sm:$0xff]
    %v1256 = vld [vmem:[#allocation8 + $0x18] sm:$0xff]
    %v1257 = vld [vmem:[#allocation8 + $0x20] sm:$0xff]
    %v1258 = vld [vmem:[#allocation8 + $0x28] sm:$0xff]
    %v1259 = vld [vmem:[#allocation8 + $0x30] sm:$0xff]
    %v1260 = vld [vmem:[#allocation8 + $0x38] sm:$0xff]
    %v1262 = vsel %vm439, %v984, 0
    %v1265 = vsel %vm439, %v989, 0
    %1267 = vmatprep.subr.mxu0 0.0
    %1268 = vmatpush1.msra.mxu0 %v1253
    %1269 = vmatprep.subr.mxu0 0.0
    %1270 = vmatpush1.msra.mxu0 %v1254
    %1271 = vmatprep.subr.mxu0 0.0
    %1272 = vmatpush1.msra.mxu0 0.0
    %1273 = vmatprep.subr.mxu0 0.0
    %1274 = vmatpush1.msra.mxu0 0.0
    %1275 = vmatprep.subr.mxu0 0.0
    %1276 = vmatpush1.msra.mxu0 0.0
    %1277 = vmatprep.subr.mxu0 0.0
    %1278 = vmatpush1.msra.mxu0 0.0
    %1279 = vmatprep.subr.mxu0 0.0
    %1280 = vmatpush1.msra.mxu0 0.0
    %1281 = vmatprep.subr.mxu0 0.0
    %1282 = vmatpush1.msra.mxu0 0.0
    %1283 = vmatprep.subr.mxu0 0.0
    %1284 = vmatpush1.msra.mxu0 0.0
    %1285 = vmatprep.subr.mxu0 0.0
    %1286 = vmatpush1.msra.mxu0 0.0
    %1287 = vmatprep.subr.mxu0 0.0
    %1288 = vmatpush1.msra.mxu0 0.0
    %1289 = vmatprep.subr.mxu0 0.0
    %1290 = vmatpush1.msra.mxu0 0.0
    %1291 = vmatprep.subr.mxu0 0.0
    %1292 = vmatpush1.msra.mxu0 0.0
    %1293 = vmatprep.subr.mxu0 0.0
    %1294 = vmatpush1.msra.mxu0 0.0
    %1295 = vmatprep.subr.mxu0 0.0
    %1296 = vmatpush1.msra.mxu0 0.0
    %1297 = vmatprep.subr.mxu0 0.0
    %1298 = vmatpush1.msra.mxu0 0.0
    %1299 = vmatprep.subr.mxu0 0.0
    %1300 = vmatpush1.msra.mxu0 0.0
    %1301 = vmatprep.subr.mxu0 0.0
    %1302 = vmatpush1.msra.mxu0 0.0
    %1303 = vmatprep.subr.mxu0 0.0
    %1304 = vmatpush1.msra.mxu0 0.0
    %1305 = vmatprep.subr.mxu0 0.0
    %1306 = vmatpush1.msra.mxu0 0.0
    %1307 = vmatprep.subr.mxu0 0.0
    %1308 = vmatpush1.msra.mxu0 0.0
    %1309 = vmatprep.subr.mxu0 0.0
    %1310 = vmatpush1.msra.mxu0 0.0
    %1311 = vmatprep.subr.mxu0 0.0
    %1312 = vmatpush1.msra.mxu0 0.0
    %1313 = vmatprep.subr.mxu0 0.0
    %1314 = vmatpush1.msra.mxu0 0.0
    %1315 = vmatprep.subr.mxu0 0.0
    %1316 = vmatpush1.msra.mxu0 0.0
    %1317 = vmatprep.subr.mxu0 0.0
    %1318 = vmatpush1.msra.mxu0 0.0
    %1319 = vmatprep.subr.mxu0 0.0
    %1320 = vmatpush1.msra.mxu0 0.0
    %1321 = vmatprep.subr.mxu0 0.0
    %1322 = vmatpush1.msra.mxu0 0.0
    %1323 = vmatprep.subr.mxu0 0.0
    %1324 = vmatpush1.msra.mxu0 0.0
    %1325 = vmatprep.subr.mxu0 0.0
    %1326 = vmatpush1.msra.mxu0 0.0
    %1327 = vmatprep.subr.mxu0 0.0
    %1328 = vmatpush1.msra.mxu0 0.0
    %1329 = vmatprep.subr.mxu0 0.0
    %1330 = vmatpush1.msra.mxu0 0.0
    %1331 = vmatprep.mubr.f32.mxu0 0.0
    %1332 = vmatmul.mubr.f32.gmra.mrb[0].mxu0 %v1262
    %v1333 = vpop.f32.mrb[0].mxu0
    %v1334 = vadd.f32 0.0, %v1333
    %v1335 = vpop.f32.mrb[0].mxu0
    %1336 = vmatprep.mubr.f32.mxu0 0.0
    %1337 = vmatmul.mubr.f32.gmra.mrb[0].mxu0 %v1265
    %v1338 = vpop.f32.mrb[0].mxu0
    %v1339 = vadd.f32 0.0, %v1338
    %v1340 = vpop.f32.mrb[0].mxu0
    %1341 = vdwg.mxu0
    %v1343 = vsel %vm439, %v1071, 0
    %v1346 = vsel %vm439, %v1076, 0
    %1348 = vmatprep.subr.mxu0 0.0
    %1349 = vmatpush1.msra.mxu0 %v1255
    %1350 = vmatprep.subr.mxu0 0.0
    %1351 = vmatpush1.msra.mxu0 %v1256
    %1352 = vmatprep.subr.mxu0 0.0
    %1353 = vmatpush1.msra.mxu0 0.0
    %1354 = vmatprep.subr.mxu0 0.0
    %1355 = vmatpush1.msra.mxu0 0.0
    %1356 = vmatprep.subr.mxu0 0.0
    %1357 = vmatpush1.msra.mxu0 0.0
    %1358 = vmatprep.subr.mxu0 0.0
    %1359 = vmatpush1.msra.mxu0 0.0
    %1360 = vmatprep.subr.mxu0 0.0
    %1361 = vmatpush1.msra.mxu0 0.0
    %1362 = vmatprep.subr.mxu0 0.0
    %1363 = vmatpush1.msra.mxu0 0.0
    %1364 = vmatprep.subr.mxu0 0.0
    %1365 = vmatpush1.msra.mxu0 0.0
    %1366 = vmatprep.subr.mxu0 0.0
    %1367 = vmatpush1.msra.mxu0 0.0
    %1368 = vmatprep.subr.mxu0 0.0
    %1369 = vmatpush1.msra.mxu0 0.0
    %1370 = vmatprep.subr.mxu0 0.0
    %1371 = vmatpush1.msra.mxu0 0.0
    %1372 = vmatprep.subr.mxu0 0.0
    %1373 = vmatpush1.msra.mxu0 0.0
    %1374 = vmatprep.subr.mxu0 0.0
    %1375 = vmatpush1.msra.mxu0 0.0
    %1376 = vmatprep.subr.mxu0 0.0
    %1377 = vmatpush1.msra.mxu0 0.0
    %1378 = vmatprep.subr.mxu0 0.0
    %1379 = vmatpush1.msra.mxu0 0.0
    %1380 = vmatprep.subr.mxu0 0.0
    %1381 = vmatpush1.msra.mxu0 0.0
    %1382 = vmatprep.subr.mxu0 0.0
    %1383 = vmatpush1.msra.mxu0 0.0
    %1384 = vmatprep.subr.mxu0 0.0
    %1385 = vmatpush1.msra.mxu0 0.0
    %1386 = vmatprep.subr.mxu0 0.0
    %1387 = vmatpush1.msra.mxu0 0.0
    %1388 = vmatprep.subr.mxu0 0.0
    %1389 = vmatpush1.msra.mxu0 0.0
    %1390 = vmatprep.subr.mxu0 0.0
    %1391 = vmatpush1.msra.mxu0 0.0
    %1392 = vmatprep.subr.mxu0 0.0
    %1393 = vmatpush1.msra.mxu0 0.0
    %1394 = vmatprep.subr.mxu0 0.0
    %1395 = vmatpush1.msra.mxu0 0.0
    %1396 = vmatprep.subr.mxu0 0.0
    %1397 = vmatpush1.msra.mxu0 0.0
    %1398 = vmatprep.subr.mxu0 0.0
    %1399 = vmatpush1.msra.mxu0 0.0
    %1400 = vmatprep.subr.mxu0 0.0
    %1401 = vmatpush1.msra.mxu0 0.0
    %1402 = vmatprep.subr.mxu0 0.0
    %1403 = vmatpush1.msra.mxu0 0.0
    %1404 = vmatprep.subr.mxu0 0.0
    %1405 = vmatpush1.msra.mxu0 0.0
    %1406 = vmatprep.subr.mxu0 0.0
    %1407 = vmatpush1.msra.mxu0 0.0
    %1408 = vmatprep.subr.mxu0 0.0
    %1409 = vmatpush1.msra.mxu0 0.0
    %1410 = vmatprep.subr.mxu0 0.0
    %1411 = vmatpush1.msra.mxu0 0.0
    %1412 = vmatprep.mubr.f32.mxu0 0.0
    %1413 = vmatmul.mubr.f32.gmra.mrb[0].mxu0 %v1343
    %v1414 = vpop.f32.mrb[0].mxu0
    %v1415 = vadd.f32 0.0, %v1414
    %v1416 = vpop.f32.mrb[0].mxu0
    %1417 = vmatprep.mubr.f32.mxu0 0.0
    %1418 = vmatmul.mubr.f32.gmra.mrb[0].mxu0 %v1346
    %v1419 = vpop.f32.mrb[0].mxu0
    %v1420 = vadd.f32 0.0, %v1419
    %v1421 = vpop.f32.mrb[0].mxu0
    %1422 = vdwg.mxu0
    %v1424 = vsel %vm439, %v1158, 0
    %v1427 = vsel %vm439, %v1163, 0
    %1429 = vmatprep.subr.mxu0 0.0
    %1430 = vmatpush1.msra.mxu0 %v1257
    %1431 = vmatprep.subr.mxu0 0.0
    %1432 = vmatpush1.msra.mxu0 %v1258
    %1433 = vmatprep.subr.mxu0 0.0
    %1434 = vmatpush1.msra.mxu0 0.0
    %1435 = vmatprep.subr.mxu0 0.0
    %1436 = vmatpush1.msra.mxu0 0.0
    %1437 = vmatprep.subr.mxu0 0.0
    %1438 = vmatpush1.msra.mxu0 0.0
    %1439 = vmatprep.subr.mxu0 0.0
    %1440 = vmatpush1.msra.mxu0 0.0
    %1441 = vmatprep.subr.mxu0 0.0
    %1442 = vmatpush1.msra.mxu0 0.0
    %1443 = vmatprep.subr.mxu0 0.0
    %1444 = vmatpush1.msra.mxu0 0.0
    %1445 = vmatprep.subr.mxu0 0.0
    %1446 = vmatpush1.msra.mxu0 0.0
    %1447 = vmatprep.subr.mxu0 0.0
    %1448 = vmatpush1.msra.mxu0 0.0
    %1449 = vmatprep.subr.mxu0 0.0
    %1450 = vmatpush1.msra.mxu0 0.0
    %1451 = vmatprep.subr.mxu0 0.0
    %1452 = vmatpush1.msra.mxu0 0.0
    %1453 = vmatprep.subr.mxu0 0.0
    %1454 = vmatpush1.msra.mxu0 0.0
    %1455 = vmatprep.subr.mxu0 0.0
    %1456 = vmatpush1.msra.mxu0 0.0
    %1457 = vmatprep.subr.mxu0 0.0
    %1458 = vmatpush1.msra.mxu0 0.0
    %1459 = vmatprep.subr.mxu0 0.0
    %1460 = vmatpush1.msra.mxu0 0.0
    %1461 = vmatprep.subr.mxu0 0.0
    %1462 = vmatpush1.msra.mxu0 0.0
    %1463 = vmatprep.subr.mxu0 0.0
    %1464 = vmatpush1.msra.mxu0 0.0
    %1465 = vmatprep.subr.mxu0 0.0
    %1466 = vmatpush1.msra.mxu0 0.0
    %1467 = vmatprep.subr.mxu0 0.0
    %1468 = vmatpush1.msra.mxu0 0.0
    %1469 = vmatprep.subr.mxu0 0.0
    %1470 = vmatpush1.msra.mxu0 0.0
    %1471 = vmatprep.subr.mxu0 0.0
    %1472 = vmatpush1.msra.mxu0 0.0
    %1473 = vmatprep.subr.mxu0 0.0
    %1474 = vmatpush1.msra.mxu0 0.0
    %1475 = vmatprep.subr.mxu0 0.0
    %1476 = vmatpush1.msra.mxu0 0.0
    %1477 = vmatprep.subr.mxu0 0.0
    %1478 = vmatpush1.msra.mxu0 0.0
    %1479 = vmatprep.subr.mxu0 0.0
    %1480 = vmatpush1.msra.mxu0 0.0
    %1481 = vmatprep.subr.mxu0 0.0
    %1482 = vmatpush1.msra.mxu0 0.0
    %1483 = vmatprep.subr.mxu0 0.0
    %1484 = vmatpush1.msra.mxu0 0.0
    %1485 = vmatprep.subr.mxu0 0.0
    %1486 = vmatpush1.msra.mxu0 0.0
    %1487 = vmatprep.subr.mxu0 0.0
    %1488 = vmatpush1.msra.mxu0 0.0
    %1489 = vmatprep.subr.mxu0 0.0
    %1490 = vmatpush1.msra.mxu0 0.0
    %1491 = vmatprep.subr.mxu0 0.0
    %1492 = vmatpush1.msra.mxu0 0.0
    %1493 = vmatprep.mubr.f32.mxu0 0.0
    %1494 = vmatmul.mubr.f32.gmra.mrb[0].mxu0 %v1424
    %v1495 = vpop.f32.mrb[0].mxu0
    %v1496 = vadd.f32 0.0, %v1495
    %v1497 = vpop.f32.mrb[0].mxu0
    %1498 = vmatprep.mubr.f32.mxu0 0.0
    %1499 = vmatmul.mubr.f32.gmra.mrb[0].mxu0 %v1427
    %v1500 = vpop.f32.mrb[0].mxu0
    %v1501 = vadd.f32 0.0, %v1500
    %v1502 = vpop.f32.mrb[0].mxu0
    %1503 = vdwg.mxu0
    %v1505 = vsel %vm439, %v1245, 0
    %v1508 = vsel %vm439, %v1250, 0
    %1510 = vmatprep.subr.mxu0 0.0
    %1511 = vmatpush1.msra.mxu0 %v1259
    %1512 = vmatprep.subr.mxu0 0.0
    %1513 = vmatpush1.msra.mxu0 %v1260
    %1514 = vmatprep.subr.mxu0 0.0
    %1515 = vmatpush1.msra.mxu0 0.0
    %1516 = vmatprep.subr.mxu0 0.0
    %1517 = vmatpush1.msra.mxu0 0.0
    %1518 = vmatprep.subr.mxu0 0.0
    %1519 = vmatpush1.msra.mxu0 0.0
    %1520 = vmatprep.subr.mxu0 0.0
    %1521 = vmatpush1.msra.mxu0 0.0
    %1522 = vmatprep.subr.mxu0 0.0
    %1523 = vmatpush1.msra.mxu0 0.0
    %1524 = vmatprep.subr.mxu0 0.0
    %1525 = vmatpush1.msra.mxu0 0.0
    %1526 = vmatprep.subr.mxu0 0.0
    %1527 = vmatpush1.msra.mxu0 0.0
    %1528 = vmatprep.subr.mxu0 0.0
    %1529 = vmatpush1.msra.mxu0 0.0
    %1530 = vmatprep.subr.mxu0 0.0
    %1531 = vmatpush1.msra.mxu0 0.0
    %1532 = vmatprep.subr.mxu0 0.0
    %1533 = vmatpush1.msra.mxu0 0.0
    %1534 = vmatprep.subr.mxu0 0.0
    %1535 = vmatpush1.msra.mxu0 0.0
    %1536 = vmatprep.subr.mxu0 0.0
    %1537 = vmatpush1.msra.mxu0 0.0
    %1538 = vmatprep.subr.mxu0 0.0
    %1539 = vmatpush1.msra.mxu0 0.0
    %1540 = vmatprep.subr.mxu0 0.0
    %1541 = vmatpush1.msra.mxu0 0.0
    %1542 = vmatprep.subr.mxu0 0.0
    %1543 = vmatpush1.msra.mxu0 0.0
    %1544 = vmatprep.subr.mxu0 0.0
    %1545 = vmatpush1.msra.mxu0 0.0
    %1546 = vmatprep.subr.mxu0 0.0
    %1547 = vmatpush1.msra.mxu0 0.0
    %1548 = vmatprep.subr.mxu0 0.0
    %1549 = vmatpush1.msra.mxu0 0.0
    %1550 = vmatprep.subr.mxu0 0.0
    %1551 = vmatpush1.msra.mxu0 0.0
    %1552 = vmatprep.subr.mxu0 0.0
    %1553 = vmatpush1.msra.mxu0 0.0
    %1554 = vmatprep.subr.mxu0 0.0
    %1555 = vmatpush1.msra.mxu0 0.0
    %1556 = vmatprep.subr.mxu0 0.0
    %1557 = vmatpush1.msra.mxu0 0.0
    %1558 = vmatprep.subr.mxu0 0.0
    %1559 = vmatpush1.msra.mxu0 0.0
    %1560 = vmatprep.subr.mxu0 0.0
    %1561 = vmatpush1.msra.mxu0 0.0
    %1562 = vmatprep.subr.mxu0 0.0
    %1563 = vmatpush1.msra.mxu0 0.0
    %1564 = vmatprep.subr.mxu0 0.0
    %1565 = vmatpush1.msra.mxu0 0.0
    %1566 = vmatprep.subr.mxu0 0.0
    %1567 = vmatpush1.msra.mxu0 0.0
    %1568 = vmatprep.subr.mxu0 0.0
    %1569 = vmatpush1.msra.mxu0 0.0
    %1570 = vmatprep.subr.mxu0 0.0
    %1571 = vmatpush1.msra.mxu0 0.0
    %1572 = vmatprep.subr.mxu0 0.0
    %1573 = vmatpush1.msra.mxu0 0.0
    %1574 = vmatprep.mubr.f32.mxu0 0.0
    %1575 = vmatmul.mubr.f32.gmra.mrb[0].mxu0 %v1505
    %v1576 = vpop.f32.mrb[0].mxu0
    %v1577 = vadd.f32 0.0, %v1576
    %v1578 = vpop.f32.mrb[0].mxu0
    %1579 = vmatprep.mubr.f32.mxu0 0.0
    %1580 = vmatmul.mubr.f32.gmra.mrb[0].mxu0 %v1508
    %v1581 = vpop.f32.mrb[0].mxu0
    %v1582 = vadd.f32 0.0, %v1581
    %v1583 = vpop.f32.mrb[0].mxu0
    %1584 = vdwg.mxu0
    %v1585 = vadd.f32 %v1334, %v1415
    %v1586 = vadd.f32 %v1339, %v1420
    %v1587 = vadd.f32 %v1496, %v1577
    %v1588 = vadd.f32 %v1501, %v1582
    %v1589 = vld [vmem:[%s4] sm:$0x1]
    %v1591 = vlaneseq
    %v1592 = vshrl.u32 %v1591, 7
    %v1593 = vsub.s32 0, %v1592
    %v1594 = vrot.slane %v1589, %v1593
    %v1596 = vadd.f32 %v1585, %v1594
    %v1597 = vadd.f32 %v1586, %v1594
    %v1598 = vadd.f32 %v1587, %v1594
    %v1599 = vadd.f32 %v1588, %v1594
    %1600 = vst.msk [vmem:[#allocation10] sm:$0xff] %vm108, %v1596
    %1601 = vst.msk [vmem:[#allocation10 + $0x8] sm:$0xff] %vm108, %v1597
    %1602 = vst.msk [vmem:[#allocation10 + $0x10] sm:$0xff] %vm108, %v1598
    %1603 = vst.msk [vmem:[#allocation10 + $0x18] sm:$0xff] %vm108, %v1599
    // Predicated region
    $region38: #{tpu_custom_call.1} parent=1 // pred_check
      _
    $region39: #{tpu_custom_call.1} parent=1 // pred_check_branch
      %1605 = sbr.rel (0) target = $region41
    $region40: #{tpu_custom_call.1} parent=1 // pred_region
      %s1607 = ssub.s32 512, 512
      %1608 = vsyncadd [#allocation4], %s1607
      %s1609 = sshll.u32 [#allocation10], 4
      %s1610 = int_to_ptr.vmem [resolvable:$true] %s1609
      %1615 = dma.vmem_to_hbm [thread:$0]  %s1610, 512, %s5, [#allocation4], 128, 128, 8
    $region41: #{tpu_custom_call.1} parent=1 // pred_fallthru
      _
    // Predicated region
    $region42: #{tpu_custom_call.1} parent=1 // pred_check
      _
    $region43: #{tpu_custom_call.1} parent=1 // pred_check_branch
      %1617 = sbr.rel (0) target = $region45
    $region44: #{tpu_custom_call.1} parent=1 // pred_region
      %1618 = dma.done [#allocation4], 512
    $region45: #{tpu_custom_call.1} parent=1 // pred_fallthru
      _
    %1619 = vsyncpa [#allocation3], 1
    %1620 = vsyncpa [#allocation6], 1
    %1621 = vsyncpa [#allocation9], 1
    %1622 = vsyncpa [#allocation4], 1

</llo_original>
